<compile_context>
chip_gen: v6e
topology: v6e:2x2x1
jax: 0.10.0
libtpu: 0.0.40
codegen_flags: <defaults>
</compile_context>

<pallas_src>
import math
from functools import partial

import jax
import jax.numpy as jnp
from jax import lax
from jax.experimental import pallas as pl
from jax.experimental.pallas import tpu as pltpu

NEG_INF = -1e30  # finite "minus infinity": avoids (-inf) - (-inf) = NaN in the
                 # online-softmax update while still underflowing exp() to 0.


def _layernorm_f32(h, w, b, eps):
    mu = jnp.mean(h, axis=-1, keepdims=True)
    var = jnp.mean((h - mu) ** 2, axis=-1, keepdims=True)
    return (h - mu) * lax.rsqrt(var + eps) * w + b


# ----------------------------------------------------------------------------
# Kernel 1: LayerNorm-1 + QKV projection -> head-major bf16 q, k, v.
# ----------------------------------------------------------------------------
def ln_qkv_kernel(x_ref, ln1_w_ref, ln1_b_ref,
                  wq_ref, wk_ref, wv_ref, bq_ref, bk_ref, bv_ref,
                  q_out, k_out, v_out, *, n_head, eps, scale):
    x = x_ref[0]                                     # (TS, D) f32
    ts, d = x.shape
    hd = d // n_head

    ln1 = _layernorm_f32(x, ln1_w_ref[0], ln1_b_ref[0], eps)
    ln1_b16 = ln1.astype(jnp.bfloat16)

    def proj(w_ref, b_ref):
        return jnp.dot(ln1_b16, w_ref[...],
                       preferred_element_type=jnp.float32) + b_ref[0]

    q = proj(wq_ref, bq_ref) * scale                 # fold 1/sqrt(hd) into q
    k = proj(wk_ref, bk_ref)
    v = proj(wv_ref, bv_ref)

    def to_head_major(t):                            # (TS, D) -> (H, TS, hd)
        return t.reshape(ts, n_head, hd).transpose(1, 0, 2).astype(jnp.bfloat16)

    q_out[0] = to_head_major(q)
    k_out[0] = to_head_major(k)
    v_out[0] = to_head_major(v)


# ----------------------------------------------------------------------------
# Kernel 2: flash attention (online softmax over kv tiles) + proj + residual
#           + LN2 + MLP (gelu_new) + residual + optional ln_f.
# ----------------------------------------------------------------------------
def attn_mlp_kernel(x_ref, q_ref, k_ref, v_ref,
                    wo_ref, bo_ref, ln2_w_ref, ln2_b_ref,
                    wfc_ref, bfc_ref, wmp_ref, bmp_ref,
                    lnf_w_ref, lnf_b_ref,
                    out_ref,
                    m_scr, l_scr, acc_scr,
                    *, apply_ln_f, eps):
    qi = pl.program_id(1)
    ki = pl.program_id(2)
    nk = pl.num_programs(2)

    n_head, tq, hd = q_ref.shape[1], q_ref.shape[2], q_ref.shape[3]
    tk = k_ref.shape[2]
    d = x_ref.shape[2]

    @pl.when(ki == 0)
    def _init():
        m_scr[...] = jnp.full_like(m_scr, NEG_INF)
        l_scr[...] = jnp.zeros_like(l_scr)
        acc_scr[...] = jnp.zeros_like(acc_scr)

    # Skip kv tiles lying entirely above the causal diagonal.
    @pl.when(ki * tk <= qi * tq + (tq - 1))
    def _online_softmax_step():
        qh = q_ref[0]                                # (H, TQ, hd) bf16, pre-scaled
        kh = k_ref[0]                                # (H, TK, hd) bf16
        vh = v_ref[0]                                # (H, TK, hd) bf16

        # Head-batched scores; contraction on the last dim of both (no k.T).
        s = jnp.einsum("hqd,hkd->hqk", qh, kh,
                       preferred_element_type=jnp.float32)   # (H, TQ, TK) f32

        rows = qi * tq + lax.broadcasted_iota(jnp.int32, (tq, tk), 0)
        cols = ki * tk + lax.broadcasted_iota(jnp.int32, (tq, tk), 1)
        s = jnp.where((rows >= cols)[None, :, :], s, NEG_INF)

        m_prev = m_scr[...]                                   # (H, TQ)
        m_new = jnp.maximum(m_prev, jnp.max(s, axis=-1))
        alpha = jnp.exp(m_prev - m_new)
        p = jnp.exp(s - m_new[:, :, None])                    # f32
        l_scr[...] = alpha * l_scr[...] + jnp.sum(p, axis=-1)
        acc_scr[...] = alpha[:, :, None] * acc_scr[...] + jnp.einsum(
            "hqk,hkd->hqd", p.astype(jnp.bfloat16), vh,
            preferred_element_type=jnp.float32)
        m_scr[...] = m_new

    @pl.when(ki == nk - 1)
    def _finalize():
        inv_l = pl.reciprocal(l_scr[...], approx=True)        # EUP slot
        attn = acc_scr[...] * inv_l[:, :, None]               # (H, TQ, hd) f32
        attn = attn.transpose(1, 0, 2).reshape(tq, d)         # (TQ, D)

        attn = jnp.dot(attn.astype(jnp.bfloat16), wo_ref[...],
                       preferred_element_type=jnp.float32) + bo_ref[0]
        x = x_ref[0] + attn                                   # residual 1

        ln2 = _layernorm_f32(x, ln2_w_ref[0], ln2_b_ref[0], eps)
        h = jnp.dot(ln2.astype(jnp.bfloat16), wfc_ref[...],
                    preferred_element_type=jnp.float32) + bfc_ref[0]
        c = math.sqrt(2.0 / math.pi)                          # gelu_new (f32)
        h = 0.5 * h * (1.0 + jnp.tanh(c * (h + 0.044715 * h * h * h)))
        mlp = jnp.dot(h.astype(jnp.bfloat16), wmp_ref[...],
                      preferred_element_type=jnp.float32) + bmp_ref[0]
        x = x + mlp                                           # residual 2

        if apply_ln_f:
            x = _layernorm_f32(x, lnf_w_ref[0], lnf_b_ref[0], eps)

        out_ref[0] = x.astype(out_ref.dtype)


# ----------------------------------------------------------------------------
# Wrapper
# ----------------------------------------------------------------------------
PARAM_ORDER = [
    "ln1_w", "ln1_b", "w_qkv", "b_qkv", "w_attn_proj", "b_attn_proj",
    "ln2_w", "ln2_b", "w_fc", "b_fc", "w_mlp_proj", "b_mlp_proj",
    "lnf_w", "lnf_b",
]


def _pick_seq_tile(s):
    for cand in (512, 256, 128):
        if s % cand == 0:
            return cand
    return s


def _vmem_limit(*byte_terms):
    est = int(sum(byte_terms)) + (8 << 20)        # headroom for intermediates
    return max(32 << 20, min(56 << 20, est))      # stay below v7x 64 MiB phys


def gpt_block_pipe(attention_mask, hidden_states, params, *, n_head,
                   eps=1e-5, apply_ln_f=True, seq_tile=None):
    """Pallas implementation of GPTBlockPipe.forward((attention_mask, hidden))."""
    B, S, D = hidden_states.shape
    hd = D // n_head
    bf16 = jnp.bfloat16

    ts = seq_tile if seq_tile is not None else _pick_seq_tile(S)
    assert S % ts == 0
    tq = tk = ts
    ns, nq, nk = S // ts, S // tq, S // tk
    scale = 1.0 / math.sqrt(hd)

    # Parameter prep (cheap one-off XLA ops): split fused QKV, cast to bf16.
    w_qkv, b_qkv = params["w_qkv"], params["b_qkv"]
    wq, wk, wv = (w_qkv[:, i * D:(i + 1) * D].astype(bf16) for i in range(3))
    bq, bk, bv = (b_qkv[:, i * D:(i + 1) * D] for i in range(3))
    wo = params["w_attn_proj"].astype(bf16)
    wfc = params["w_fc"].astype(bf16)
    wmp = params["w_mlp_proj"].astype(bf16)

    def full1(a):   # grid-invariant spec for kernel 1 (2 grid axes)
        return pl.BlockSpec(a.shape, lambda b, si: (0,) * a.ndim)

    def full2(a):   # grid-invariant spec for kernel 2 (3 grid axes)
        return pl.BlockSpec(a.shape, lambda b, q, k: (0,) * a.ndim)

    # ------------------------- kernel 1: LN1 + QKV --------------------------
    qkv_sd = jax.ShapeDtypeStruct((B, n_head, S, hd), bf16)
    qkv_out_spec = pl.BlockSpec((1, n_head, ts, hd), lambda b, si: (b, 0, si, 0))
    q, k, v = pl.pallas_call(
        partial(ln_qkv_kernel, n_head=n_head, eps=eps, scale=scale),
        out_shape=(qkv_sd, qkv_sd, qkv_sd),
        grid=(B, ns),
        in_specs=[
            pl.BlockSpec((1, ts, D), lambda b, si: (b, si, 0)),
            full1(params["ln1_w"]), full1(params["ln1_b"]),
            full1(wq), full1(wk), full1(wv),
            full1(bq), full1(bk), full1(bv),
        ],
        out_specs=(qkv_out_spec, qkv_out_spec, qkv_out_spec),
        compiler_params=pltpu.CompilerParams(
            dimension_semantics=("parallel", "parallel"),
            vmem_limit_bytes=_vmem_limit(
                2 * (ts * D * 4 + 3 * n_head * ts * hd * 2) * 2,   # dbl-buffered blocks
                2 * (3 * D * D * 2 + 8 * D * 4)),                  # weights / params
        ),
    )(hidden_states, params["ln1_w"], params["ln1_b"], wq, wk, wv, bq, bk, bv)

    # --------------------- kernel 2: attention + MLP ------------------------
    out = pl.pallas_call(
        partial(attn_mlp_kernel, apply_ln_f=apply_ln_f, eps=eps),
        out_shape=jax.ShapeDtypeStruct((B, S, D), hidden_states.dtype),
        grid=(B, nq, nk),
        in_specs=[
            pl.BlockSpec((1, tq, D), lambda b, q_, k_: (b, q_, 0)),            # x (residual)
            pl.BlockSpec((1, n_head, tq, hd), lambda b, q_, k_: (b, 0, q_, 0)),  # q
            pl.BlockSpec((1, n_head, tk, hd), lambda b, q_, k_: (b, 0, k_, 0)),  # k
            pl.BlockSpec((1, n_head, tk, hd), lambda b, q_, k_: (b, 0, k_, 0)),  # v
            full2(wo), full2(params["b_attn_proj"]),
            full2(params["ln2_w"]), full2(params["ln2_b"]),
            full2(wfc), full2(params["b_fc"]),
            full2(wmp), full2(params["b_mlp_proj"]),
            full2(params["lnf_w"]), full2(params["lnf_b"]),
        ],
        out_specs=pl.BlockSpec((1, tq, D), lambda b, q_, k_: (b, q_, 0)),
        scratch_shapes=[
            pltpu.VMEM((n_head, tq), jnp.float32),       # m: running max
            pltpu.VMEM((n_head, tq), jnp.float32),       # l: running denom
            pltpu.VMEM((n_head, tq, hd), jnp.float32),   # acc: unnormalized out
        ],
        compiler_params=pltpu.CompilerParams(
            dimension_semantics=("parallel", "parallel", "arbitrary"),
            vmem_limit_bytes=_vmem_limit(
                2 * (2 * tq * D * 4 + n_head * tq * hd * 2
                     + 2 * n_head * tk * hd * 2) * 2,            # dbl-buffered blocks
                2 * (9 * D * D * 2 + 12 * D * 4),                # bf16 weights + biases
                (2 * n_head * tq + n_head * tq * hd) * 4,        # scratch
                2 * n_head * tq * tk * 4 + 2 * tq * 4 * D * 4),  # s/p + MLP hidden
        ),
    )(hidden_states, q, k, v,
      wo, params["b_attn_proj"], params["ln2_w"], params["ln2_b"],
      wfc, params["b_fc"], wmp, params["b_mlp_proj"],
      params["lnf_w"], params["lnf_b"])

    # attention_mask is a pass-through (the block is called with
    # attention_mask=None in the PyTorch module).
    return attention_mask, out


# ----------------------------------------------------------------------------
# Pure-JAX f32 reference (mirrors HF GPT2Block with attention_mask=None).
# ----------------------------------------------------------------------------
def _ref_single(x, p, n_head, eps, apply_ln_f):
    S, D = x.shape
    hd = D // n_head

    def ln(h, w, b):
        mu = h.mean(-1, keepdims=True)
        var = ((h - mu) ** 2).mean(-1, keepdims=True)
        return (h - mu) / jnp.sqrt(var + eps) * w[0] + b[0]

    h1 = ln(x, p["ln1_w"], p["ln1_b"])
    qkv = h1 @ p["w_qkv"] + p["b_qkv"][0]
    q, k, v = qkv[:, :D], qkv[:, D:2 * D], qkv[:, 2 * D:]
    q = q.reshape(S, n_head, hd).transpose(1, 0, 2)
    k = k.reshape(S, n_head, hd).transpose(1, 0, 2)
    v = v.reshape(S, n_head, hd).transpose(1, 0, 2)
    s = jnp.einsum("hqd,hkd->hqk", q, k) / math.sqrt(hd)
    causal = jnp.tril(jnp.ones((S, S), bool))
    s = jnp.where(causal[None], s, jnp.finfo(jnp.float32).min)
    p_attn = jax.nn.softmax(s, axis=-1)
    a = jnp.einsum("hqk,hkd->hqd", p_attn, v).transpose(1, 0, 2).reshape(S, D)
    a = a @ p["w_attn_proj"] + p["b_attn_proj"][0]
    x = x + a
    h2 = ln(x, p["ln2_w"], p["ln2_b"])
    m = h2 @ p["w_fc"] + p["b_fc"][0]
    c = math.sqrt(2.0 / math.pi)
    m = 0.5 * m * (1.0 + jnp.tanh(c * (m + 0.044715 * m ** 3)))
    m = m @ p["w_mlp_proj"] + p["b_mlp_proj"][0]
    x = x + m
    if apply_ln_f:
        x = ln(x, p["lnf_w"], p["lnf_b"])
    return x


def init_params(key, D, n_head):
    ks = jax.random.split(key, 4)
    std = 0.02
    return {
        "ln1_w": jnp.ones((1, D), jnp.float32),
        "ln1_b": jnp.zeros((1, D), jnp.float32),
        "w_qkv": std * jax.random.normal(ks[0], (D, 3 * D), jnp.float32),
        "b_qkv": jnp.zeros((1, 3 * D), jnp.float32),
        "w_attn_proj": std * jax.random.normal(ks[1], (D, D), jnp.float32),
        "b_attn_proj": jnp.zeros((1, D), jnp.float32),
        "ln2_w": jnp.ones((1, D), jnp.float32),
        "ln2_b": jnp.zeros((1, D), jnp.float32),
        "w_fc": std * jax.random.normal(ks[2], (D, 4 * D), jnp.float32),
        "b_fc": jnp.zeros((1, 4 * D), jnp.float32),
        "w_mlp_proj": std * jax.random.normal(ks[3], (4 * D, D), jnp.float32),
        "b_mlp_proj": jnp.zeros((1, D), jnp.float32),
        "lnf_w": jnp.ones((1, D), jnp.float32),
        "lnf_b": jnp.zeros((1, D), jnp.float32),
    }


if __name__ == "__main__":
    # Small shapes; seq_tile=8 forces a 2x2 (q-tile x kv-tile) grid so the
    # online-softmax accumulation and causal block skipping are exercised.
    B, S, D, H = 2, 16, 32, 4
    eps = 1e-5
    key = jax.random.PRNGKey(0)
    k_x, k_p = jax.random.split(key)

    hidden_states = jax.random.normal(k_x, (B, S, D), jnp.float32)
    attention_mask = jnp.ones((B, S), jnp.float32)   # pass-through, unused
    params = init_params(k_p, D, H)

    mask_out, out = gpt_block_pipe(attention_mask, hidden_states, params,
                                   n_head=H, eps=eps, apply_ln_f=True,
                                   seq_tile=8)
    out = jax.block_until_ready(out)

    ref = jax.vmap(lambda x: _ref_single(x, params, H, eps, True))(hidden_states)
    assert out.shape == hidden_states.shape
    max_diff = float(jnp.max(jnp.abs(out - ref)))
    # bf16 MXU operands + approx reciprocal => looser tolerance than pure f32.
    assert max_diff < 2e-2, f"max abs diff {max_diff}"
    print("KERNEL_OK")
</pallas_src>

<mosaic_0001>
module attributes {stable_mosaic.version = 11 : i64} {
  func.func @ln_qkv_kernel(%arg0: i32, %arg1: i32, %arg2: memref<1x8x32xf32, #tpu.memory_space<vmem>>, %arg3: memref<1x32xf32, #tpu.memory_space<vmem>>, %arg4: memref<1x32xf32, #tpu.memory_space<vmem>>, %arg5: memref<32x32xbf16, #tpu.memory_space<vmem>>, %arg6: memref<32x32xbf16, #tpu.memory_space<vmem>>, %arg7: memref<32x32xbf16, #tpu.memory_space<vmem>>, %arg8: memref<1x32xf32, #tpu.memory_space<vmem>>, %arg9: memref<1x32xf32, #tpu.memory_space<vmem>>, %arg10: memref<1x32xf32, #tpu.memory_space<vmem>>, %arg11: memref<1x4x8x8xbf16, #tpu.memory_space<vmem>>, %arg12: memref<1x4x8x8xbf16, #tpu.memory_space<vmem>>, %arg13: memref<1x4x8x8xbf16, #tpu.memory_space<vmem>>) attributes {dimension_semantics = [#tpu.dimension_semantics<parallel>, #tpu.dimension_semantics<parallel>], iteration_bounds = array<i64: 2, 2>, scalar_prefetch = 0 : i64, scratch_operands = 0 : i64, tpu.core_type = #tpu.core_type<tc>, window_params = [{transform_indices = @transform_0, window_bounds = array<i64: 1, 8, 32>}, {pipeline_mode = #tpu.pipeline_mode<synchronous>, transform_indices = @transform_1, window_bounds = array<i64: 1, 32>}, {pipeline_mode = #tpu.pipeline_mode<synchronous>, transform_indices = @transform_2, window_bounds = array<i64: 1, 32>}, {pipeline_mode = #tpu.pipeline_mode<synchronous>, transform_indices = @transform_3, window_bounds = array<i64: 32, 32>}, {pipeline_mode = #tpu.pipeline_mode<synchronous>, transform_indices = @transform_4, window_bounds = array<i64: 32, 32>}, {pipeline_mode = #tpu.pipeline_mode<synchronous>, transform_indices = @transform_5, window_bounds = array<i64: 32, 32>}, {pipeline_mode = #tpu.pipeline_mode<synchronous>, transform_indices = @transform_6, window_bounds = array<i64: 1, 32>}, {pipeline_mode = #tpu.pipeline_mode<synchronous>, transform_indices = @transform_7, window_bounds = array<i64: 1, 32>}, {pipeline_mode = #tpu.pipeline_mode<synchronous>, transform_indices = @transform_8, window_bounds = array<i64: 1, 32>}, {transform_indices = @transform_9, window_bounds = array<i64: 1, 4, 8, 8>}, {transform_indices = @transform_10, window_bounds = array<i64: 1, 4, 8, 8>}, {transform_indices = @transform_11, window_bounds = array<i64: 1, 4, 8, 8>}]} {
    %c0 = arith.constant 0 : index
    %c0_0 = arith.constant 0 : index
    %c0_1 = arith.constant 0 : index
    %0 = vector.load %arg2[%c0, %c0_0, %c0_1] : memref<1x8x32xf32, #tpu.memory_space<vmem>>, vector<1x8x32xf32>
    %1 = vector.shape_cast %0 : vector<1x8x32xf32> to vector<8x32xf32>
    %c0_2 = arith.constant 0 : index
    %c0_3 = arith.constant 0 : index
    %2 = vector.load %arg3[%c0_2, %c0_3] : memref<1x32xf32, #tpu.memory_space<vmem>>, vector<1x32xf32>
    %3 = vector.shape_cast %2 : vector<1x32xf32> to vector<32xf32>
    %c0_4 = arith.constant 0 : index
    %c0_5 = arith.constant 0 : index
    %4 = vector.load %arg4[%c0_4, %c0_5] : memref<1x32xf32, #tpu.memory_space<vmem>>, vector<1x32xf32>
    %5 = vector.shape_cast %4 : vector<1x32xf32> to vector<32xf32>
    %cst = arith.constant dense<0.000000e+00> : vector<8xf32>
    %6 = vector.multi_reduction <add>, %1, %cst [1] : vector<8x32xf32> to vector<8xf32>
    %7 = vector.shape_cast %6 : vector<8xf32> to vector<8x1xf32>
    %cst_6 = arith.constant 3.200000e+01 : f32
    %8 = vector.broadcast %cst_6 : f32 to vector<8x1xf32>
    %9 = arith.divf %7, %8 : vector<8x1xf32>
    %10 = vector.broadcast %9 : vector<8x1xf32> to vector<8x32xf32>
    %11 = arith.subf %1, %10 : vector<8x32xf32>
    %12 = arith.mulf %11, %11 : vector<8x32xf32>
    %cst_7 = arith.constant dense<0.000000e+00> : vector<8xf32>
    %13 = vector.multi_reduction <add>, %12, %cst_7 [1] : vector<8x32xf32> to vector<8xf32>
    %14 = vector.shape_cast %13 : vector<8xf32> to vector<8x1xf32>
    %cst_8 = arith.constant 3.200000e+01 : f32
    %15 = vector.broadcast %cst_8 : f32 to vector<8x1xf32>
    %16 = arith.divf %14, %15 : vector<8x1xf32>
    %17 = vector.broadcast %9 : vector<8x1xf32> to vector<8x32xf32>
    %18 = arith.subf %1, %17 : vector<8x32xf32>
    %cst_9 = arith.constant 9.99999974E-6 : f32
    %19 = vector.broadcast %cst_9 : f32 to vector<8x1xf32>
    %20 = arith.addf %16, %19 : vector<8x1xf32>
    %21 = math.rsqrt %20 : vector<8x1xf32>
    %22 = vector.broadcast %21 : vector<8x1xf32> to vector<8x32xf32>
    %23 = arith.mulf %18, %22 : vector<8x32xf32>
    %24 = vector.shape_cast %3 : vector<32xf32> to vector<1x32xf32>
    %25 = vector.broadcast %24 : vector<1x32xf32> to vector<8x32xf32>
    %26 = arith.mulf %23, %25 : vector<8x32xf32>
    %27 = vector.shape_cast %5 : vector<32xf32> to vector<1x32xf32>
    %28 = vector.broadcast %27 : vector<1x32xf32> to vector<8x32xf32>
    %29 = arith.addf %26, %28 : vector<8x32xf32>
    %30 = arith.truncf %29 : vector<8x32xf32> to vector<8x32xbf16>
    %c0_10 = arith.constant 0 : index
    %c0_11 = arith.constant 0 : index
    %31 = vector.load %arg5[%c0_10, %c0_11] : memref<32x32xbf16, #tpu.memory_space<vmem>>, vector<32x32xbf16>
    %cst_12 = arith.constant dense<0.000000e+00> : vector<8x32xf32>
    %32 = tpu.matmul %30, %31, %cst_12 {dimension_numbers = #tpu.dot_dimension_numbers<[1], [0], [0], [1], [0, 0, 1, 1], [], []>} : vector<8x32xbf16>, vector<32x32xbf16>, vector<8x32xf32> -> vector<8x32xf32>
    %c0_13 = arith.constant 0 : index
    %c0_14 = arith.constant 0 : index
    %33 = vector.load %arg8[%c0_13, %c0_14] : memref<1x32xf32, #tpu.memory_space<vmem>>, vector<1x32xf32>
    %34 = vector.shape_cast %33 : vector<1x32xf32> to vector<32xf32>
    %35 = vector.shape_cast %34 : vector<32xf32> to vector<1x32xf32>
    %36 = vector.broadcast %35 : vector<1x32xf32> to vector<8x32xf32>
    %37 = arith.addf %32, %36 : vector<8x32xf32>
    %cst_15 = arith.constant 0.353553385 : f32
    %38 = vector.broadcast %cst_15 : f32 to vector<8x32xf32>
    %39 = arith.mulf %37, %38 : vector<8x32xf32>
    %c0_16 = arith.constant 0 : index
    %c0_17 = arith.constant 0 : index
    %40 = vector.load %arg6[%c0_16, %c0_17] : memref<32x32xbf16, #tpu.memory_space<vmem>>, vector<32x32xbf16>
    %cst_18 = arith.constant dense<0.000000e+00> : vector<8x32xf32>
    %41 = tpu.matmul %30, %40, %cst_18 {dimension_numbers = #tpu.dot_dimension_numbers<[1], [0], [0], [1], [0, 0, 1, 1], [], []>} : vector<8x32xbf16>, vector<32x32xbf16>, vector<8x32xf32> -> vector<8x32xf32>
    %c0_19 = arith.constant 0 : index
    %c0_20 = arith.constant 0 : index
    %42 = vector.load %arg9[%c0_19, %c0_20] : memref<1x32xf32, #tpu.memory_space<vmem>>, vector<1x32xf32>
    %43 = vector.shape_cast %42 : vector<1x32xf32> to vector<32xf32>
    %44 = vector.shape_cast %43 : vector<32xf32> to vector<1x32xf32>
    %45 = vector.broadcast %44 : vector<1x32xf32> to vector<8x32xf32>
    %46 = arith.addf %41, %45 : vector<8x32xf32>
    %c0_21 = arith.constant 0 : index
    %c0_22 = arith.constant 0 : index
    %47 = vector.load %arg7[%c0_21, %c0_22] : memref<32x32xbf16, #tpu.memory_space<vmem>>, vector<32x32xbf16>
    %cst_23 = arith.constant dense<0.000000e+00> : vector<8x32xf32>
    %48 = tpu.matmul %30, %47, %cst_23 {dimension_numbers = #tpu.dot_dimension_numbers<[1], [0], [0], [1], [0, 0, 1, 1], [], []>} : vector<8x32xbf16>, vector<32x32xbf16>, vector<8x32xf32> -> vector<8x32xf32>
    %c0_24 = arith.constant 0 : index
    %c0_25 = arith.constant 0 : index
    %49 = vector.load %arg10[%c0_24, %c0_25] : memref<1x32xf32, #tpu.memory_space<vmem>>, vector<1x32xf32>
    %50 = vector.shape_cast %49 : vector<1x32xf32> to vector<32xf32>
    %51 = vector.shape_cast %50 : vector<32xf32> to vector<1x32xf32>
    %52 = vector.broadcast %51 : vector<1x32xf32> to vector<8x32xf32>
    %53 = arith.addf %48, %52 : vector<8x32xf32>
    %54 = vector.shape_cast %39 : vector<8x32xf32> to vector<8x4x8xf32>
    %55 = tpu.transpose %54, [1, 0, 2] : vector<8x4x8xf32> -> vector<4x8x8xf32>
    %56 = arith.truncf %55 : vector<4x8x8xf32> to vector<4x8x8xbf16>
    %c0_26 = arith.constant 0 : index
    %c0_27 = arith.constant 0 : index
    %c0_28 = arith.constant 0 : index
    %c0_29 = arith.constant 0 : index
    %57 = vector.load %arg11[%c0_26, %c0_27, %c0_28, %c0_29] : memref<1x4x8x8xbf16, #tpu.memory_space<vmem>>, vector<1x4x8x8xbf16>
    %58 = vector.shape_cast %57 : vector<1x4x8x8xbf16> to vector<4x8x8xbf16>
    %59 = vector.shape_cast %56 : vector<4x8x8xbf16> to vector<1x4x8x8xbf16>
    tpu.vector_store %arg11[%c0_26, %c0_27, %c0_28, %c0_29], %59 {strides = array<i32>} : memref<1x4x8x8xbf16, #tpu.memory_space<vmem>>, vector<1x4x8x8xbf16>,
    %60 = vector.shape_cast %46 : vector<8x32xf32> to vector<8x4x8xf32>
    %61 = tpu.transpose %60, [1, 0, 2] : vector<8x4x8xf32> -> vector<4x8x8xf32>
    %62 = arith.truncf %61 : vector<4x8x8xf32> to vector<4x8x8xbf16>
    %c0_30 = arith.constant 0 : index
    %c0_31 = arith.constant 0 : index
    %c0_32 = arith.constant 0 : index
    %c0_33 = arith.constant 0 : index
    %63 = vector.load %arg12[%c0_30, %c0_31, %c0_32, %c0_33] : memref<1x4x8x8xbf16, #tpu.memory_space<vmem>>, vector<1x4x8x8xbf16>
    %64 = vector.shape_cast %63 : vector<1x4x8x8xbf16> to vector<4x8x8xbf16>
    %65 = vector.shape_cast %62 : vector<4x8x8xbf16> to vector<1x4x8x8xbf16>
    tpu.vector_store %arg12[%c0_30, %c0_31, %c0_32, %c0_33], %65 {strides = array<i32>} : memref<1x4x8x8xbf16, #tpu.memory_space<vmem>>, vector<1x4x8x8xbf16>,
    %66 = vector.shape_cast %53 : vector<8x32xf32> to vector<8x4x8xf32>
    %67 = tpu.transpose %66, [1, 0, 2] : vector<8x4x8xf32> -> vector<4x8x8xf32>
    %68 = arith.truncf %67 : vector<4x8x8xf32> to vector<4x8x8xbf16>
    %c0_34 = arith.constant 0 : index
    %c0_35 = arith.constant 0 : index
    %c0_36 = arith.constant 0 : index
    %c0_37 = arith.constant 0 : index
    %69 = vector.load %arg13[%c0_34, %c0_35, %c0_36, %c0_37] : memref<1x4x8x8xbf16, #tpu.memory_space<vmem>>, vector<1x4x8x8xbf16>
    %70 = vector.shape_cast %69 : vector<1x4x8x8xbf16> to vector<4x8x8xbf16>
    %71 = vector.shape_cast %68 : vector<4x8x8xbf16> to vector<1x4x8x8xbf16>
    tpu.vector_store %arg13[%c0_34, %c0_35, %c0_36, %c0_37], %71 {strides = array<i32>} : memref<1x4x8x8xbf16, #tpu.memory_space<vmem>>, vector<1x4x8x8xbf16>,
    return
  }
  func.func @transform_0(%arg0: i32, %arg1: i32) -> (i32, i32, i32) {
    %c0_i32 = arith.constant 0 : i32
    %c0_i32_0 = arith.constant 0 : i32
    return %arg0, %arg1, %c0_i32 : i32, i32, i32
  }
  func.func @transform_1(%arg0: i32, %arg1: i32) -> (i32, i32) {
    %c0_i32 = arith.constant 0 : i32
    %c0_i32_0 = arith.constant 0 : i32
    %c0_i32_1 = arith.constant 0 : i32
    return %c0_i32, %c0_i32_0 : i32, i32
  }
  func.func @transform_2(%arg0: i32, %arg1: i32) -> (i32, i32) {
    %c0_i32 = arith.constant 0 : i32
    %c0_i32_0 = arith.constant 0 : i32
    %c0_i32_1 = arith.constant 0 : i32
    return %c0_i32, %c0_i32_0 : i32, i32
  }
  func.func @transform_3(%arg0: i32, %arg1: i32) -> (i32, i32) {
    %c0_i32 = arith.constant 0 : i32
    %c0_i32_0 = arith.constant 0 : i32
    %c0_i32_1 = arith.constant 0 : i32
    return %c0_i32, %c0_i32_0 : i32, i32
  }
  func.func @transform_4(%arg0: i32, %arg1: i32) -> (i32, i32) {
    %c0_i32 = arith.constant 0 : i32
    %c0_i32_0 = arith.constant 0 : i32
    %c0_i32_1 = arith.constant 0 : i32
    return %c0_i32, %c0_i32_0 : i32, i32
  }
  func.func @transform_5(%arg0: i32, %arg1: i32) -> (i32, i32) {
    %c0_i32 = arith.constant 0 : i32
    %c0_i32_0 = arith.constant 0 : i32
    %c0_i32_1 = arith.constant 0 : i32
    return %c0_i32, %c0_i32_0 : i32, i32
  }
  func.func @transform_6(%arg0: i32, %arg1: i32) -> (i32, i32) {
    %c0_i32 = arith.constant 0 : i32
    %c0_i32_0 = arith.constant 0 : i32
    %c0_i32_1 = arith.constant 0 : i32
    return %c0_i32, %c0_i32_0 : i32, i32
  }
  func.func @transform_7(%arg0: i32, %arg1: i32) -> (i32, i32) {
    %c0_i32 = arith.constant 0 : i32
    %c0_i32_0 = arith.constant 0 : i32
    %c0_i32_1 = arith.constant 0 : i32
    return %c0_i32, %c0_i32_0 : i32, i32
  }
  func.func @transform_8(%arg0: i32, %arg1: i32) -> (i32, i32) {
    %c0_i32 = arith.constant 0 : i32
    %c0_i32_0 = arith.constant 0 : i32
    %c0_i32_1 = arith.constant 0 : i32
    return %c0_i32, %c0_i32_0 : i32, i32
  }
  func.func @transform_9(%arg0: i32, %arg1: i32) -> (i32, i32, i32, i32) {
    %c0_i32 = arith.constant 0 : i32
    %c0_i32_0 = arith.constant 0 : i32
    %c0_i32_1 = arith.constant 0 : i32
    return %arg0, %c0_i32, %arg1, %c0_i32_0 : i32, i32, i32, i32
  }
  func.func @transform_10(%arg0: i32, %arg1: i32) -> (i32, i32, i32, i32) {
    %c0_i32 = arith.constant 0 : i32
    %c0_i32_0 = arith.constant 0 : i32
    %c0_i32_1 = arith.constant 0 : i32
    return %arg0, %c0_i32, %arg1, %c0_i32_0 : i32, i32, i32, i32
  }
  func.func @transform_11(%arg0: i32, %arg1: i32) -> (i32, i32, i32, i32) {
    %c0_i32 = arith.constant 0 : i32
    %c0_i32_0 = arith.constant 0 : i32
    %c0_i32_1 = arith.constant 0 : i32
    return %arg0, %c0_i32, %arg1, %c0_i32_0 : i32, i32, i32, i32
  }
}

</mosaic_0001>

<llo_original>
// kernel: tpu_custom_call.1
$region0: #{tpu_custom_call.1}
  #allocation0 [shape = 'u32[]', space=smem, size = 0x4, offset = 0x4, fixed_abs, tag = 'smem constant byte address 0x4 - core index']
  #allocation1 [shape = 'u32[144,128]{1,0:T(1,128)}', space=vmem, size = 0x12000, scoped, tag = 'internal scratch']
  %s0 = inlined_call_operand.hbm [shape: f32[2,16,32], index: 0, kind: input, shape index: {}]
  %s1 = inlined_call_operand.vmem [shape: f32[1,32], index: 1, kind: input, shape index: {}]
  %s2 = inlined_call_operand.vmem [shape: f32[1,32], index: 2, kind: input, shape index: {}]
  %s3 = inlined_call_operand.hbm [shape: bf16[32,32], index: 3, kind: input, shape index: {}]
  %s4 = inlined_call_operand.hbm [shape: bf16[32,32], index: 4, kind: input, shape index: {}]
  %s5 = inlined_call_operand.hbm [shape: bf16[32,32], index: 5, kind: input, shape index: {}]
  %s6 = inlined_call_operand.vmem [shape: f32[1,32], index: 6, kind: input, shape index: {}]
  %s7 = inlined_call_operand.vmem [shape: f32[1,32], index: 7, kind: input, shape index: {}]
  %s8 = inlined_call_operand.vmem [shape: f32[1,32], index: 8, kind: input, shape index: {}]
  %s9 = inlined_call_operand.vmem [shape: bf16[2,4,16,8], index: 9, kind: output, shape index: {0}]
  %s10 = inlined_call_operand.vmem [shape: bf16[2,4,16,8], index: 10, kind: output, shape index: {1}]
  %s11 = inlined_call_operand.vmem [shape: bf16[2,4,16,8], index: 11, kind: output, shape index: {2}]
  %12 = xla_tuple %s9, %s10, %s11
  %s13 = sld [smem:[#allocation0]]
  $region212: #{tpu_custom_call.1} parent=0
    _
  %s15 = ssub.s32 1, %s13
  %s16 = scalar_select 0, %s15, %s13
  $region1: #{tpu_custom_call.1} parent=0
    #allocation2 [shape = 'u8[8192]{0}', space=vmem, size = 0x2000, scoped, tag = 'input window, operand 0']
    #allocation3 [shape = 's32[2]{0}', space=sflag, size = 0x8, scoped, tag = 'scoped memory for tpu_custom_call.1']
    #allocation4 [shape = 'u8[8192]{0}', space=vmem, size = 0x2000, scoped, tag = 'input window, operand 3, single buffered']
    #allocation5 [shape = 's32[1]{0}', space=sflag, size = 0x4, scoped, tag = 'scoped memory for tpu_custom_call.1']
    #allocation6 [shape = 'u8[8192]{0}', space=vmem, size = 0x2000, scoped, tag = 'input window, operand 4, single buffered']
    #allocation7 [shape = 'u8[8192]{0}', space=vmem, size = 0x2000, scoped, tag = 'input window, operand 5, single buffered']
    #allocation8 [shape = 's32[1]{0}', space=sflag, size = 0x4, scoped, tag = 'scoped memory for tpu_custom_call.1']
    #allocation9 [shape = 'u8[16384]{0}', space=vmem, size = 0x4000, scoped, tag = 'output window, operand 0']
    #allocation10 [shape = 'u8[16384]{0}', space=vmem, size = 0x4000, scoped, tag = 'output window, operand 1']
    #allocation11 [shape = 'u8[16384]{0}', space=vmem, size = 0x4000, scoped, tag = 'output window, operand 2']
    %17 = vsyncpa [#allocation3], 0
    %s18 = scalar_lea.sflag [#allocation3], 1
    %19 = vsyncpa %s18, 0
    %20 = vsyncpa [#allocation5], 0
    %21 = vsyncpa [#allocation8], 0
    loop: start=0, step=1, limit=6
    $region2: #{tpu_custom_call.1} parent=1 // loop_pre_header
      _
    $region3: #{tpu_custom_call.1} parent=1 // loop_header
      %s23 = sphi 0, %s27
      %p24 = scmp.ge.s32.totalorder %s23, 6
      %s30 = sphi 0, %s42
      %s31 = sphi 0, %s38
      %s32 = sphi 0, %s30
      %s33 = sphi 0, %s31
      %s34 = sphi 0, %s32
      %s35 = sphi 0, %s33
      %s47 = sphi 0, %s49
      %s50 = sphi 0, %s47
      %s51 = sphi 0, %s50
      %s67 = sphi 0, %s51
      %s71 = sphi 0, %s71
      %s73 = sphi 0, %s71
      %s74 = sphi 0, %s73
      %s88 = sphi 0, %s74
      %s92 = sphi 0, %s92
      %s94 = sphi 0, %s92
      %s95 = sphi 0, %s94
      %s109 = sphi 0, %s95
      %s113 = sphi 0, %s113
      %s115 = sphi 0, %s113
      %s116 = sphi 0, %s115
      %s130 = sphi 0, %s116
      %s134 = sphi 0, %s134
      %s136 = sphi 0, %s134
      %s137 = sphi 0, %s136
      %s151 = sphi 0, %s137
      %s155 = sphi 0, %s155
      %s157 = sphi 0, %s155
      %s158 = sphi 0, %s157
      %s172 = sphi 0, %s158
      %s176 = sphi 0, %s176
      %s178 = sphi 0, %s176
      %s179 = sphi 0, %s178
      %s193 = sphi 0, %s179
      %s197 = sphi 0, %s197
      %s199 = sphi 0, %s197
      %s200 = sphi 0, %s199
      %s214 = sphi 0, %s200
      %s218 = sphi 0, %s218
      %s220 = sphi 0, %s218
      %s221 = sphi 0, %s220
      %s235 = sphi 0, %s221
      %s243 = sphi 0, %s245
      %s246 = sphi 0, %s243
      %s247 = sphi 0, %s246
      %s263 = sphi 0, %s247
      %s271 = sphi 0, %s273
      %s274 = sphi 0, %s271
      %s275 = sphi 0, %s274
      %s291 = sphi 0, %s275
      %s299 = sphi 0, %s301
      %s302 = sphi 0, %s299
      %s303 = sphi 0, %s302
      %s319 = sphi 0, %s303
    $region4: #{tpu_custom_call.1} parent=1 // loop_header_branch
      %26 = sbr.rel (%p24) target = $region8
    $region5: #{tpu_custom_call.1} parent=1 // loop_body
      %s28 = ssub.s32 %s23, 1
      %s29 = ssub.s32 %s23, 2
      %s36 = sadd.s32 1, %s31
      %p37 = scmp.ge.s32.totalorder %s36, 2
      %s38 = scalar_select %p37, 0, %s36
      %s39 = sadd.s32 1, %s30
      %s40 = scalar_select %p37, %s39, %s30
      %p41 = scmp.ge.s32.totalorder %s40, 2
      %s42 = scalar_select %p41, 0, %s40
      %s43 = ssub.s32 %s30, %s42
      %s44 = ssub.s32 %s31, %s38
      %s45 = sor.u32 %s43, %s44
      %p46 = scmp.eq.s32.totalorder %s45, 0
      %s48 = sadd.s32 %s47, 1
      %s49 = scalar_select %p46, %s47, %s48
      %p52 = pneg %p46
      %p53 = scmp.eq.s32.totalorder %s23, 3
      %p54 = por %p52, %p53
      %p55 = scmp.ne.s32.totalorder %s47, %s50
      %p56 = scmp.eq.s32.totalorder %s23, 0
      %p57 = por %p55, %p56
      %p58 = scmp.ne.s32.totalorder %s47, %s50
      %p59 = scmp.eq.s32.totalorder %s28, 3
      %p60 = por %p58, %p59
      %p61 = scmp.ne.s32.totalorder %s50, %s51
      %p62 = scmp.eq.s32.totalorder %s28, 0
      %p63 = por %p61, %p62
      %p64 = scmp.ne.s32.totalorder %s50, %s51
      %p65 = scmp.eq.s32.totalorder %s29, 3
      %p66 = por %p64, %p65
      %p68 = scmp.ne.s32.totalorder %s51, %s67
      %p69 = scmp.eq.s32.totalorder %s29, 0
      %p70 = por %p68, %p69
      %s72 = sadd.s32 %s71, 1
      %p75 = scmp.eq.s32.totalorder %s23, 3
      %p76 = scmp.ne.s32.totalorder %s71, %s73
      %p77 = scmp.eq.s32.totalorder %s23, 0
      %p78 = por %p76, %p77
      %p79 = scmp.ne.s32.totalorder %s71, %s73
      %p80 = scmp.eq.s32.totalorder %s28, 3
      %p81 = por %p79, %p80
      %p82 = scmp.ne.s32.totalorder %s73, %s74
      %p83 = scmp.eq.s32.totalorder %s28, 0
      %p84 = por %p82, %p83
      %p85 = scmp.ne.s32.totalorder %s73, %s74
      %p86 = scmp.eq.s32.totalorder %s29, 3
      %p87 = por %p85, %p86
      %p89 = scmp.ne.s32.totalorder %s74, %s88
      %p90 = scmp.eq.s32.totalorder %s29, 0
      %p91 = por %p89, %p90
      %s93 = sadd.s32 %s92, 1
      %p96 = scmp.eq.s32.totalorder %s23, 3
      %p97 = scmp.ne.s32.totalorder %s92, %s94
      %p98 = scmp.eq.s32.totalorder %s23, 0
      %p99 = por %p97, %p98
      %p100 = scmp.ne.s32.totalorder %s92, %s94
      %p101 = scmp.eq.s32.totalorder %s28, 3
      %p102 = por %p100, %p101
      %p103 = scmp.ne.s32.totalorder %s94, %s95
      %p104 = scmp.eq.s32.totalorder %s28, 0
      %p105 = por %p103, %p104
      %p106 = scmp.ne.s32.totalorder %s94, %s95
      %p107 = scmp.eq.s32.totalorder %s29, 3
      %p108 = por %p106, %p107
      %p110 = scmp.ne.s32.totalorder %s95, %s109
      %p111 = scmp.eq.s32.totalorder %s29, 0
      %p112 = por %p110, %p111
      %s114 = sadd.s32 %s113, 1
      %p117 = scmp.eq.s32.totalorder %s23, 3
      %p118 = scmp.ne.s32.totalorder %s113, %s115
      %p119 = scmp.eq.s32.totalorder %s23, 0
      %p120 = por %p118, %p119
      %p121 = scmp.ne.s32.totalorder %s113, %s115
      %p122 = scmp.eq.s32.totalorder %s28, 3
      %p123 = por %p121, %p122
      %p124 = scmp.ne.s32.totalorder %s115, %s116
      %p125 = scmp.eq.s32.totalorder %s28, 0
      %p126 = por %p124, %p125
      %p127 = scmp.ne.s32.totalorder %s115, %s116
      %p128 = scmp.eq.s32.totalorder %s29, 3
      %p129 = por %p127, %p128
      %p131 = scmp.ne.s32.totalorder %s116, %s130
      %p132 = scmp.eq.s32.totalorder %s29, 0
      %p133 = por %p131, %p132
      %s135 = sadd.s32 %s134, 1
      %p138 = scmp.eq.s32.totalorder %s23, 3
      %p139 = scmp.ne.s32.totalorder %s134, %s136
      %p140 = scmp.eq.s32.totalorder %s23, 0
      %p141 = por %p139, %p140
      %p142 = scmp.ne.s32.totalorder %s134, %s136
      %p143 = scmp.eq.s32.totalorder %s28, 3
      %p144 = por %p142, %p143
      %p145 = scmp.ne.s32.totalorder %s136, %s137
      %p146 = scmp.eq.s32.totalorder %s28, 0
      %p147 = por %p145, %p146
      %p148 = scmp.ne.s32.totalorder %s136, %s137
      %p149 = scmp.eq.s32.totalorder %s29, 3
      %p150 = por %p148, %p149
      %p152 = scmp.ne.s32.totalorder %s137, %s151
      %p153 = scmp.eq.s32.totalorder %s29, 0
      %p154 = por %p152, %p153
      %s156 = sadd.s32 %s155, 1
      %p159 = scmp.eq.s32.totalorder %s23, 3
      %p160 = scmp.ne.s32.totalorder %s155, %s157
      %p161 = scmp.eq.s32.totalorder %s23, 0
      %p162 = por %p160, %p161
      %p163 = scmp.ne.s32.totalorder %s155, %s157
      %p164 = scmp.eq.s32.totalorder %s28, 3
      %p165 = por %p163, %p164
      %p166 = scmp.ne.s32.totalorder %s157, %s158
      %p167 = scmp.eq.s32.totalorder %s28, 0
      %p168 = por %p166, %p167
      %p169 = scmp.ne.s32.totalorder %s157, %s158
      %p170 = scmp.eq.s32.totalorder %s29, 3
      %p171 = por %p169, %p170
      %p173 = scmp.ne.s32.totalorder %s158, %s172
      %p174 = scmp.eq.s32.totalorder %s29, 0
      %p175 = por %p173, %p174
      %s177 = sadd.s32 %s176, 1
      %p180 = scmp.eq.s32.totalorder %s23, 3
      %p181 = scmp.ne.s32.totalorder %s176, %s178
      %p182 = scmp.eq.s32.totalorder %s23, 0
      %p183 = por %p181, %p182
      %p184 = scmp.ne.s32.totalorder %s176, %s178
      %p185 = scmp.eq.s32.totalorder %s28, 3
      %p186 = por %p184, %p185
      %p187 = scmp.ne.s32.totalorder %s178, %s179
      %p188 = scmp.eq.s32.totalorder %s28, 0
      %p189 = por %p187, %p188
      %p190 = scmp.ne.s32.totalorder %s178, %s179
      %p191 = scmp.eq.s32.totalorder %s29, 3
      %p192 = por %p190, %p191
      %p194 = scmp.ne.s32.totalorder %s179, %s193
      %p195 = scmp.eq.s32.totalorder %s29, 0
      %p196 = por %p194, %p195
      %s198 = sadd.s32 %s197, 1
      %p201 = scmp.eq.s32.totalorder %s23, 3
      %p202 = scmp.ne.s32.totalorder %s197, %s199
      %p203 = scmp.eq.s32.totalorder %s23, 0
      %p204 = por %p202, %p203
      %p205 = scmp.ne.s32.totalorder %s197, %s199
      %p206 = scmp.eq.s32.totalorder %s28, 3
      %p207 = por %p205, %p206
      %p208 = scmp.ne.s32.totalorder %s199, %s200
      %p209 = scmp.eq.s32.totalorder %s28, 0
      %p210 = por %p208, %p209
      %p211 = scmp.ne.s32.totalorder %s199, %s200
      %p212 = scmp.eq.s32.totalorder %s29, 3
      %p213 = por %p211, %p212
      %p215 = scmp.ne.s32.totalorder %s200, %s214
      %p216 = scmp.eq.s32.totalorder %s29, 0
      %p217 = por %p215, %p216
      %s219 = sadd.s32 %s218, 1
      %p222 = scmp.eq.s32.totalorder %s23, 3
      %p223 = scmp.ne.s32.totalorder %s218, %s220
      %p224 = scmp.eq.s32.totalorder %s23, 0
      %p225 = por %p223, %p224
      %p226 = scmp.ne.s32.totalorder %s218, %s220
      %p227 = scmp.eq.s32.totalorder %s28, 3
      %p228 = por %p226, %p227
      %p229 = scmp.ne.s32.totalorder %s220, %s221
      %p230 = scmp.eq.s32.totalorder %s28, 0
      %p231 = por %p229, %p230
      %p232 = scmp.ne.s32.totalorder %s220, %s221
      %p233 = scmp.eq.s32.totalorder %s29, 3
      %p234 = por %p232, %p233
      %p236 = scmp.ne.s32.totalorder %s221, %s235
      %p237 = scmp.eq.s32.totalorder %s29, 0
      %p238 = por %p236, %p237
      %s239 = ssub.s32 %s30, %s42
      %s240 = ssub.s32 %s31, %s38
      %s241 = sor.u32 %s239, %s240
      %p242 = scmp.eq.s32.totalorder %s241, 0
      %s244 = sadd.s32 %s243, 1
      %s245 = scalar_select %p242, %s243, %s244
      %p248 = pneg %p242
      %p249 = scmp.eq.s32.totalorder %s23, 3
      %p250 = por %p248, %p249
      %p251 = scmp.ne.s32.totalorder %s243, %s246
      %p252 = scmp.eq.s32.totalorder %s23, 0
      %p253 = por %p251, %p252
      %p254 = scmp.ne.s32.totalorder %s243, %s246
      %p255 = scmp.eq.s32.totalorder %s28, 3
      %p256 = por %p254, %p255
      %p257 = scmp.ne.s32.totalorder %s246, %s247
      %p258 = scmp.eq.s32.totalorder %s28, 0
      %p259 = por %p257, %p258
      %p260 = scmp.ne.s32.totalorder %s246, %s247
      %p261 = scmp.eq.s32.totalorder %s29, 3
      %p262 = por %p260, %p261
      %p264 = scmp.ne.s32.totalorder %s247, %s263
      %p265 = scmp.eq.s32.totalorder %s29, 0
      %p266 = por %p264, %p265
      %s267 = ssub.s32 %s30, %s42
      %s268 = ssub.s32 %s31, %s38
      %s269 = sor.u32 %s267, %s268
      %p270 = scmp.eq.s32.totalorder %s269, 0
      %s272 = sadd.s32 %s271, 1
      %s273 = scalar_select %p270, %s271, %s272
      %p276 = pneg %p270
      %p277 = scmp.eq.s32.totalorder %s23, 3
      %p278 = por %p276, %p277
      %p279 = scmp.ne.s32.totalorder %s271, %s274
      %p280 = scmp.eq.s32.totalorder %s23, 0
      %p281 = por %p279, %p280
      %p282 = scmp.ne.s32.totalorder %s271, %s274
      %p283 = scmp.eq.s32.totalorder %s28, 3
      %p284 = por %p282, %p283
      %p285 = scmp.ne.s32.totalorder %s274, %s275
      %p286 = scmp.eq.s32.totalorder %s28, 0
      %p287 = por %p285, %p286
      %p288 = scmp.ne.s32.totalorder %s274, %s275
      %p289 = scmp.eq.s32.totalorder %s29, 3
      %p290 = por %p288, %p289
      %p292 = scmp.ne.s32.totalorder %s275, %s291
      %p293 = scmp.eq.s32.totalorder %s29, 0
      %p294 = por %p292, %p293
      %s295 = ssub.s32 %s30, %s42
      %s296 = ssub.s32 %s31, %s38
      %s297 = sor.u32 %s295, %s296
      %p298 = scmp.eq.s32.totalorder %s297, 0
      %s300 = sadd.s32 %s299, 1
      %s301 = scalar_select %p298, %s299, %s300
      %p304 = pneg %p298
      %p305 = scmp.eq.s32.totalorder %s23, 3
      %p306 = por %p304, %p305
      %p307 = scmp.ne.s32.totalorder %s299, %s302
      %p308 = scmp.eq.s32.totalorder %s23, 0
      %p309 = por %p307, %p308
      %p310 = scmp.ne.s32.totalorder %s299, %s302
      %p311 = scmp.eq.s32.totalorder %s28, 3
      %p312 = por %p310, %p311
      %p313 = scmp.ne.s32.totalorder %s302, %s303
      %p314 = scmp.eq.s32.totalorder %s28, 0
      %p315 = por %p313, %p314
      %p316 = scmp.ne.s32.totalorder %s302, %s303
      %p317 = scmp.eq.s32.totalorder %s29, 3
      %p318 = por %p316, %p317
      %p320 = scmp.ne.s32.totalorder %s303, %s319
      %p321 = scmp.eq.s32.totalorder %s29, 0
      %p322 = por %p320, %p321
      %p323 = scmp.le.s32.totalorder 1, %s23
      %p324 = scmp.lt.s32.totalorder %s23, 5
      %p325 = pnand %p323, %p324
      %p326 = pneg %p325
      // Predicated region
      $region9: #{tpu_custom_call.1} parent=5 // pred_check
        _
      $region10: #{tpu_custom_call.1} parent=5 // pred_check_branch
        %328 = sbr.rel (%p325) target = $region12
      $region11: #{tpu_custom_call.1} parent=5 // pred_region
        %s329 = ssub.s32 %s23, 1
        // Predicated region
        $region13: #{tpu_custom_call.1} parent=11 // pred_check
          %p330 = pneg %p84
        $region14: #{tpu_custom_call.1} parent=11 // pred_check_branch
          %332 = sbr.rel (%p330) target = $region16
        $region15: #{tpu_custom_call.1} parent=11 // pred_region
          _
        $region16: #{tpu_custom_call.1} parent=11 // pred_fallthru
          _
        // Predicated region
        $region17: #{tpu_custom_call.1} parent=11 // pred_check
          %p333 = pneg %p105
        $region18: #{tpu_custom_call.1} parent=11 // pred_check_branch
          %335 = sbr.rel (%p333) target = $region20
        $region19: #{tpu_custom_call.1} parent=11 // pred_region
          _
        $region20: #{tpu_custom_call.1} parent=11 // pred_fallthru
          _
        // Predicated region
        $region21: #{tpu_custom_call.1} parent=11 // pred_check
          %p336 = pneg %p126
        $region22: #{tpu_custom_call.1} parent=11 // pred_check_branch
          %338 = sbr.rel (%p336) target = $region24
        $region23: #{tpu_custom_call.1} parent=11 // pred_region
          %s340 = ssub.s32 256, 256
          %341 = vsyncadd [#allocation5], %s340
          %s342 = sshll.u32 [#allocation4], 4
          %s343 = int_to_ptr.vmem [resolvable:$true] %s342
          %348 = dma.hbm_to_vmem [thread:$0]  %s3, 256, %s343, [#allocation5], 64, 64, 4
        $region24: #{tpu_custom_call.1} parent=11 // pred_fallthru
          _
        // Predicated region
        $region25: #{tpu_custom_call.1} parent=11 // pred_check
          %p349 = pneg %p147
        $region26: #{tpu_custom_call.1} parent=11 // pred_check_branch
          %351 = sbr.rel (%p349) target = $region28
        $region27: #{tpu_custom_call.1} parent=11 // pred_region
          %s353 = ssub.s32 256, 256
          %354 = vsyncadd [#allocation5], %s353
          %s355 = sshll.u32 [#allocation6], 4
          %s356 = int_to_ptr.vmem [resolvable:$true] %s355
          %361 = dma.hbm_to_vmem [thread:$0]  %s4, 256, %s356, [#allocation5], 64, 64, 4
        $region28: #{tpu_custom_call.1} parent=11 // pred_fallthru
          _
        // Predicated region
        $region29: #{tpu_custom_call.1} parent=11 // pred_check
          %p362 = pneg %p168
        $region30: #{tpu_custom_call.1} parent=11 // pred_check_branch
          %364 = sbr.rel (%p362) target = $region32
        $region31: #{tpu_custom_call.1} parent=11 // pred_region
          %s366 = ssub.s32 256, 256
          %367 = vsyncadd [#allocation8], %s366
          %s368 = sshll.u32 [#allocation7], 4
          %s369 = int_to_ptr.vmem [resolvable:$true] %s368
          %374 = dma.hbm_to_vmem [thread:$0]  %s5, 256, %s369, [#allocation8], 64, 64, 4
        $region32: #{tpu_custom_call.1} parent=11 // pred_fallthru
          _
        // Predicated region
        $region33: #{tpu_custom_call.1} parent=11 // pred_check
          %p375 = pneg %p189
        $region34: #{tpu_custom_call.1} parent=11 // pred_check_branch
          %377 = sbr.rel (%p375) target = $region36
        $region35: #{tpu_custom_call.1} parent=11 // pred_region
          _
        $region36: #{tpu_custom_call.1} parent=11 // pred_fallthru
          _
        // Predicated region
        $region37: #{tpu_custom_call.1} parent=11 // pred_check
          %p378 = pneg %p210
        $region38: #{tpu_custom_call.1} parent=11 // pred_check_branch
          %380 = sbr.rel (%p378) target = $region40
        $region39: #{tpu_custom_call.1} parent=11 // pred_region
          _
        $region40: #{tpu_custom_call.1} parent=11 // pred_fallthru
          _
        // Predicated region
        $region41: #{tpu_custom_call.1} parent=11 // pred_check
          %p381 = pneg %p231
        $region42: #{tpu_custom_call.1} parent=11 // pred_check_branch
          %383 = sbr.rel (%p381) target = $region44
        $region43: #{tpu_custom_call.1} parent=11 // pred_region
          _
        $region44: #{tpu_custom_call.1} parent=11 // pred_fallthru
          _
      $region12: #{tpu_custom_call.1} parent=5 // pred_fallthru
        _
      %p384 = scmp.lt.s32.totalorder %s23, 4
      // Predicated region
      $region45: #{tpu_custom_call.1} parent=5 // pred_check
        %p385 = pneg %p384
      $region46: #{tpu_custom_call.1} parent=5 // pred_check_branch
        %387 = sbr.rel (%p385) target = $region48
      $region47: #{tpu_custom_call.1} parent=5 // pred_region
        // Predicated region
        $region49: #{tpu_custom_call.1} parent=47 // pred_check
          %p388 = pneg %p57
        $region50: #{tpu_custom_call.1} parent=47 // pred_check_branch
          %390 = sbr.rel (%p388) target = $region52
        $region51: #{tpu_custom_call.1} parent=47 // pred_region
          %s391 = sand.u32 %s47, 1
          %s392 = scalar_lea.sflag [#allocation3], %s391
          %s393 = sand.u32 %s47, 1
          %s394 = smul.addr %s393, 8
          %s395 = scalar_lea.vmem [#allocation2], %s394
          %s397 = ssub.s32 128, 128
          %398 = vsyncadd %s392, %s397
          %s399 = smul.addr %s30, 2
          %s400 = sadd.s32 %s31, %s399
          %s401 = smul.addr %s400, 128
          %s402 = scalar_lea.hbm %s0, %s401
          %s404 = sshll.u32 %s395, 4
          %s405 = int_to_ptr.vmem [resolvable:$true] %s404
          %407 = dma.hbm_to_vmem [thread:$0]  %s402, 128, %s405, %s392
        $region52: #{tpu_custom_call.1} parent=47 // pred_fallthru
          _
      $region48: #{tpu_custom_call.1} parent=5 // pred_fallthru
        _
      %p408 = scmp.le.s32.totalorder 1, %s23
      %p409 = scmp.lt.s32.totalorder %s23, 5
      %p410 = pnand %p408, %p409
      %p411 = pneg %p410
      // Predicated region
      $region53: #{tpu_custom_call.1} parent=5 // pred_check
        _
      $region54: #{tpu_custom_call.1} parent=5 // pred_check_branch
        %413 = sbr.rel (%p410) target = $region56
      $region55: #{tpu_custom_call.1} parent=5 // pred_region
        %s414 = ssub.s32 %s23, 1
        %s415 = sand.u32 %s50, 1
        %s416 = scalar_lea.sflag [#allocation3], %s415
        %s417 = sand.u32 %s50, 1
        %s418 = smul.addr %s417, 8
        %s419 = scalar_lea.vmem [#allocation2], %s418
        // Predicated region
        $region57: #{tpu_custom_call.1} parent=55 // pred_check
          %p420 = pneg %p63
        $region58: #{tpu_custom_call.1} parent=55 // pred_check_branch
          %422 = sbr.rel (%p420) target = $region60
        $region59: #{tpu_custom_call.1} parent=55 // pred_region
          %423 = dma.done %s416, 128
        $region60: #{tpu_custom_call.1} parent=55 // pred_fallthru
          _
        // Predicated region
        $region61: #{tpu_custom_call.1} parent=55 // pred_check
          %p424 = pneg %p126
        $region62: #{tpu_custom_call.1} parent=55 // pred_check_branch
          %426 = sbr.rel (%p424) target = $region64
        $region63: #{tpu_custom_call.1} parent=55 // pred_region
          %427 = dma.done [#allocation5], 256
        $region64: #{tpu_custom_call.1} parent=55 // pred_fallthru
          _
        // Predicated region
        $region65: #{tpu_custom_call.1} parent=55 // pred_check
          %p428 = pneg %p147
        $region66: #{tpu_custom_call.1} parent=55 // pred_check_branch
          %430 = sbr.rel (%p428) target = $region68
        $region67: #{tpu_custom_call.1} parent=55 // pred_region
          %431 = dma.done [#allocation5], 256
        $region68: #{tpu_custom_call.1} parent=55 // pred_fallthru
          _
        // Predicated region
        $region69: #{tpu_custom_call.1} parent=55 // pred_check
          %p432 = pneg %p168
        $region70: #{tpu_custom_call.1} parent=55 // pred_check_branch
          %434 = sbr.rel (%p432) target = $region72
        $region71: #{tpu_custom_call.1} parent=55 // pred_region
          %435 = dma.done [#allocation8], 256
        $region72: #{tpu_custom_call.1} parent=55 // pred_fallthru
          _
        %s436 = sand.u32 %s50, 1
        %s437 = scalar_lea.sflag [#allocation3], %s436
        %s438 = sand.u32 %s50, 1
        %s439 = smul.addr %s438, 8
        %s440 = scalar_lea.vmem [#allocation2], %s439
        %p441 = pneg %p63
        %p442 = pneg %p60
        %p443 = pneg %p84
        %p444 = pneg %p81
        %p445 = pneg %p105
        %p446 = pneg %p102
        %p447 = pneg %p126
        %p448 = pneg %p123
        %p449 = pneg %p147
        %p450 = pneg %p144
        %p451 = pneg %p168
        %p452 = pneg %p165
        %p453 = pneg %p189
        %p454 = pneg %p186
        %p455 = pneg %p210
        %p456 = pneg %p207
        %p457 = pneg %p231
        %p458 = pneg %p228
        %p459 = pneg %p259
        %p460 = pneg %p256
        %s461 = sand.u32 %s246, 1
        %s462 = sand.u32 %s246, 1
        %s463 = smul.addr %s462, 16
        %s464 = scalar_lea.vmem [#allocation9], %s463
        %p465 = pneg %p287
        %p466 = pneg %p284
        %s467 = sand.u32 %s274, 1
        %s468 = sand.u32 %s274, 1
        %s469 = smul.addr %s468, 16
        %s470 = scalar_lea.vmem [#allocation10], %s469
        %p471 = pneg %p315
        %p472 = pneg %p312
        %s473 = sand.u32 %s302, 1
        %s474 = sand.u32 %s302, 1
        %s475 = smul.addr %s474, 16
        %s476 = scalar_lea.vmem [#allocation11], %s475
        %v478 = vld [vmem:[%s419] sm:$0xff]
        %v479 = vld [vmem:[%s1] sm:$0x1]
        %v480 = vld [vmem:[%s2] sm:$0x1]
        %vm481 = vcmask 261120
        %v482 = vsel %vm481, %v478, 0.0
        %483 = vadd.xlane.f32.xlu0 %v482
        %v484 = vpop.xlane.xlu0 %483
        %v485 = vrcp.pop 32.0
        %v486 = vmul.f32 %v484, %v485
        %v487 = vsub.f32 %v478, %v486
        %v488 = vmul.f32 %v487, %v487
        %v489 = vsel %vm481, %v488, 0.0
        %490 = vadd.xlane.f32.xlu0 %v489
        %v491 = vpop.xlane.xlu0 %490
        %v492 = vmul.f32 %v491, %v485
        %v493 = vadd.f32 %v492, 1e-05
        %v494 = vrsqrt.pop %v493
        %v495 = vmul.f32 %v487, %v494
        %v497 = vlaneseq
        %v498 = vshrl.u32 %v497, 7
        %v499 = vsub.s32 0, %v498
        %v500 = vrot.slane %v479, %v499
        %v502 = vmul.f32 %v495, %v500
        %v504 = vlaneseq
        %v505 = vshrl.u32 %v504, 7
        %v506 = vsub.s32 0, %v505
        %v507 = vrot.slane %v480, %v506
        %v509 = vadd.f32 %v502, %v507
        %v510 = vpack.c.bf16 %v509, %v509
        %v511 = vld [vmem:[#allocation4] sm:$0xf]
        %v512 = vld [vmem:[#allocation4 + $0x4] sm:$0xf]
        %v513 = vld [vmem:[#allocation4 + $0x8] sm:$0xf]
        %v514 = vld [vmem:[#allocation4 + $0xc] sm:$0xf]
        %v515 = vld [vmem:[%s6] sm:$0x1]
        %v517 = vlaneseq
        %v518 = vshrl.u32 %v517, 7
        %v519 = vsub.s32 0, %v518
        %v520 = vrot.slane %v515, %v519
        %v526 = vunpack.c.l.b16 %v511
        %v527 = vunpack.c.l.b16 %v512
        %v528 = vunpack.c.l.b16 %v513
        %v529 = vunpack.c.l.b16 %v514
        %v530 = vpack.c.b16 %v527, %v526
        %v531 = vpack.c.b16 %v529, %v528
        %v535 = vsel %vm481, %v510, 0
        %537 = vmatprep.subr.bf16.mxu0 0
        %538 = vmatpush1.bf16.msra.mxu0 0
        %539 = vmatprep.subr.bf16.mxu0 0
        %540 = vmatpush1.bf16.msra.mxu0 0
        %541 = vmatprep.subr.bf16.mxu0 0
        %542 = vmatpush1.bf16.msra.mxu0 0
        %543 = vmatprep.subr.bf16.mxu0 0
        %544 = vmatpush1.bf16.msra.mxu0 0
        %545 = vmatprep.subr.bf16.mxu0 0
        %546 = vmatpush1.bf16.msra.mxu0 0
        %547 = vmatprep.subr.bf16.mxu0 0
        %548 = vmatpush1.bf16.msra.mxu0 0
        %549 = vmatprep.subr.bf16.mxu0 0
        %550 = vmatpush1.bf16.msra.mxu0 %v531
        %551 = vmatprep.subr.bf16.mxu0 0
        %552 = vmatpush1.bf16.msra.mxu0 %v530
        %553 = vmatprep.subr.bf16.mxu0 0
        %554 = vmatpush2.bf16.msra.mxu0 0
        %555 = vmatprep.subr.bf16.mxu0 0
        %556 = vmatpush2.bf16.msra.mxu0 0
        %557 = vmatprep.subr.bf16.mxu0 0
        %558 = vmatpush2.bf16.msra.mxu0 0
        %559 = vmatprep.subr.bf16.mxu0 0
        %560 = vmatpush2.bf16.msra.mxu0 0
        %561 = vmatprep.subr.bf16.mxu0 0
        %562 = vmatpush2.bf16.msra.mxu0 0
        %563 = vmatprep.subr.bf16.mxu0 0
        %564 = vmatpush2.bf16.msra.mxu0 0
        %565 = vmatprep.subr.bf16.mxu0 0
        %566 = vmatpush2.bf16.msra.mxu0 0
        %567 = vmatprep.subr.bf16.mxu0 0
        %568 = vmatpush2.bf16.msra.mxu0 0
        %569 = vmatprep.mubr.bf16.mxu0 0
        %570 = vmatmul.mubr.bf16.gmra.mxu0 %v535
        %v571 = vpop.f32.mrf.mxu0
        %v572 = vadd.f32 %v520, %v571
        %v573 = vpop.f32.mrf.mxu0
        %v574 = vpop.f32.mrf.mxu0
        %v575 = vpop.f32.mrf.mxu0
        %576 = vdwg.mxu0
        %v577 = vmul.f32 %v572, 0.35355338
        %v578 = vld [vmem:[#allocation6] sm:$0xf]
        %v579 = vld [vmem:[#allocation6 + $0x4] sm:$0xf]
        %v580 = vld [vmem:[#allocation6 + $0x8] sm:$0xf]
        %v581 = vld [vmem:[#allocation6 + $0xc] sm:$0xf]
        %v582 = vld [vmem:[%s7] sm:$0x1]
        %v584 = vlaneseq
        %v585 = vshrl.u32 %v584, 7
        %v586 = vsub.s32 0, %v585
        %v587 = vrot.slane %v582, %v586
        %v593 = vunpack.c.l.b16 %v578
        %v594 = vunpack.c.l.b16 %v579
        %v595 = vunpack.c.l.b16 %v580
        %v596 = vunpack.c.l.b16 %v581
        %v597 = vpack.c.b16 %v594, %v593
        %v598 = vpack.c.b16 %v596, %v595
        %601 = vmatprep.subr.bf16.mxu0 0
        %602 = vmatpush1.bf16.msra.mxu0 0
        %603 = vmatprep.subr.bf16.mxu0 0
        %604 = vmatpush1.bf16.msra.mxu0 0
        %605 = vmatprep.subr.bf16.mxu0 0
        %606 = vmatpush1.bf16.msra.mxu0 0
        %607 = vmatprep.subr.bf16.mxu0 0
        %608 = vmatpush1.bf16.msra.mxu0 0
        %609 = vmatprep.subr.bf16.mxu0 0
        %610 = vmatpush1.bf16.msra.mxu0 0
        %611 = vmatprep.subr.bf16.mxu0 0
        %612 = vmatpush1.bf16.msra.mxu0 0
        %613 = vmatprep.subr.bf16.mxu0 0
        %614 = vmatpush1.bf16.msra.mxu0 %v598
        %615 = vmatprep.subr.bf16.mxu0 0
        %616 = vmatpush1.bf16.msra.mxu0 %v597
        %617 = vmatprep.subr.bf16.mxu0 0
        %618 = vmatpush2.bf16.msra.mxu0 0
        %619 = vmatprep.subr.bf16.mxu0 0
        %620 = vmatpush2.bf16.msra.mxu0 0
        %621 = vmatprep.subr.bf16.mxu0 0
        %622 = vmatpush2.bf16.msra.mxu0 0
        %623 = vmatprep.subr.bf16.mxu0 0
        %624 = vmatpush2.bf16.msra.mxu0 0
        %625 = vmatprep.subr.bf16.mxu0 0
        %626 = vmatpush2.bf16.msra.mxu0 0
        %627 = vmatprep.subr.bf16.mxu0 0
        %628 = vmatpush2.bf16.msra.mxu0 0
        %629 = vmatprep.subr.bf16.mxu0 0
        %630 = vmatpush2.bf16.msra.mxu0 0
        %631 = vmatprep.subr.bf16.mxu0 0
        %632 = vmatpush2.bf16.msra.mxu0 0
        %633 = vmatprep.mubr.bf16.mxu0 0
        %634 = vmatmul.mubr.bf16.gmra.mxu0 %v535
        %v635 = vpop.f32.mrf.mxu0
        %v636 = vadd.f32 %v587, %v635
        %v637 = vpop.f32.mrf.mxu0
        %v638 = vpop.f32.mrf.mxu0
        %v639 = vpop.f32.mrf.mxu0
        %640 = vdwg.mxu0
        %v641 = vld [vmem:[#allocation7] sm:$0xf]
        %v642 = vld [vmem:[#allocation7 + $0x4] sm:$0xf]
        %v643 = vld [vmem:[#allocation7 + $0x8] sm:$0xf]
        %v644 = vld [vmem:[#allocation7 + $0xc] sm:$0xf]
        %v645 = vld [vmem:[%s8] sm:$0x1]
        %v647 = vlaneseq
        %v648 = vshrl.u32 %v647, 7
        %v649 = vsub.s32 0, %v648
        %v650 = vrot.slane %v645, %v649
        %v656 = vunpack.c.l.b16 %v641
        %v657 = vunpack.c.l.b16 %v642
        %v658 = vunpack.c.l.b16 %v643
        %v659 = vunpack.c.l.b16 %v644
        %v660 = vpack.c.b16 %v657, %v656
        %v661 = vpack.c.b16 %v659, %v658
        %664 = vmatprep.subr.bf16.mxu0 0
        %665 = vmatpush1.bf16.msra.mxu0 0
        %666 = vmatprep.subr.bf16.mxu0 0
        %667 = vmatpush1.bf16.msra.mxu0 0
        %668 = vmatprep.subr.bf16.mxu0 0
        %669 = vmatpush1.bf16.msra.mxu0 0
        %670 = vmatprep.subr.bf16.mxu0 0
        %671 = vmatpush1.bf16.msra.mxu0 0
        %672 = vmatprep.subr.bf16.mxu0 0
        %673 = vmatpush1.bf16.msra.mxu0 0
        %674 = vmatprep.subr.bf16.mxu0 0
        %675 = vmatpush1.bf16.msra.mxu0 0
        %676 = vmatprep.subr.bf16.mxu0 0
        %677 = vmatpush1.bf16.msra.mxu0 %v661
        %678 = vmatprep.subr.bf16.mxu0 0
        %679 = vmatpush1.bf16.msra.mxu0 %v660
        %680 = vmatprep.subr.bf16.mxu0 0
        %681 = vmatpush2.bf16.msra.mxu0 0
        %682 = vmatprep.subr.bf16.mxu0 0
        %683 = vmatpush2.bf16.msra.mxu0 0
        %684 = vmatprep.subr.bf16.mxu0 0
        %685 = vmatpush2.bf16.msra.mxu0 0
        %686 = vmatprep.subr.bf16.mxu0 0
        %687 = vmatpush2.bf16.msra.mxu0 0
        %688 = vmatprep.subr.bf16.mxu0 0
        %689 = vmatpush2.bf16.msra.mxu0 0
        %690 = vmatprep.subr.bf16.mxu0 0
        %691 = vmatpush2.bf16.msra.mxu0 0
        %692 = vmatprep.subr.bf16.mxu0 0
        %693 = vmatpush2.bf16.msra.mxu0 0
        %694 = vmatprep.subr.bf16.mxu0 0
        %695 = vmatpush2.bf16.msra.mxu0 0
        %696 = vmatprep.mubr.bf16.mxu0 0
        %697 = vmatmul.mubr.bf16.gmra.mxu0 %v535
        %v698 = vpop.f32.mrf.mxu0
        %v699 = vadd.f32 %v650, %v698
        %v700 = vpop.f32.mrf.mxu0
        %v701 = vpop.f32.mrf.mxu0
        %v702 = vpop.f32.mrf.mxu0
        %703 = vdwg.mxu0
        %705 = vrot.lane.b32.xlu0 %v577, 120
        %v706 = vpop.permute.xlu0 %705
        %708 = vrot.lane.b32.xlu0 %v577, 112
        %v709 = vpop.permute.xlu0 %708
        %711 = vrot.lane.b32.xlu0 %v577, 104
        %v712 = vpop.permute.xlu0 %711
        %v714 = vcombine.low %v577, %v709
        %v715 = vcombine.high %v577, %v709
        %v717 = vunpack.c.l.s4 1983009808
        %v718 = vunpack.c.0.s8 %v717
        %v719 = vlaneseq
        %v720 = vshrl.u32 %v719, 7
        %v721 = vsub.s32 %v718, %v720
        %v722 = vrot.slane %v714, %v721
        %v724 = vunpack.c.l.s4 1983009808
        %v725 = vunpack.c.0.s8 %v724
        %v726 = vlaneseq
        %v727 = vshrl.u32 %v726, 7
        %v728 = vsub.s32 %v725, %v727
        %v729 = vrot.slane %v715, %v728
        %v730 = vcombine.low %v706, %v712
        %v731 = vcombine.high %v706, %v712
        %v733 = vunpack.c.l.s4 1983009808
        %v734 = vunpack.c.0.s8 %v733
        %v735 = vlaneseq
        %v736 = vshrl.u32 %v735, 7
        %v737 = vsub.s32 %v734, %v736
        %v738 = vrot.slane %v730, %v737
        %v740 = vunpack.c.l.s4 1983009808
        %v741 = vunpack.c.0.s8 %v740
        %v742 = vlaneseq
        %v743 = vshrl.u32 %v742, 7
        %v744 = vsub.s32 %v741, %v743
        %v745 = vrot.slane %v731, %v744
        %v746 = vcombine.low %v722, %v738
        %v747 = vcombine.high %v722, %v738
        %v749 = vunpack.c.l.s4 1934713408
        %v750 = vunpack.c.0.s8 %v749
        %v751 = vlaneseq
        %v752 = vshrl.u32 %v751, 7
        %v753 = vsub.s32 %v750, %v752
        %v754 = vrot.slane %v746, %v753
        %v756 = vunpack.c.l.s4 1934713408
        %v757 = vunpack.c.0.s8 %v756
        %v758 = vlaneseq
        %v759 = vshrl.u32 %v758, 7
        %v760 = vsub.s32 %v757, %v759
        %v761 = vrot.slane %v747, %v760
        %v762 = vcombine.low %v729, %v745
        %v763 = vcombine.high %v729, %v745
        %v765 = vunpack.c.l.s4 1934713408
        %v766 = vunpack.c.0.s8 %v765
        %v767 = vlaneseq
        %v768 = vshrl.u32 %v767, 7
        %v769 = vsub.s32 %v766, %v768
        %v770 = vrot.slane %v762, %v769
        %v772 = vunpack.c.l.s4 1934713408
        %v773 = vunpack.c.0.s8 %v772
        %v774 = vlaneseq
        %v775 = vshrl.u32 %v774, 7
        %v776 = vsub.s32 %v773, %v775
        %v777 = vrot.slane %v763, %v776
        %v778 = vcombine.high %v754, 0.0
        %v779 = vcombine.high %v761, 0.0
        %v780 = vcombine.high %v770, 0.0
        %v781 = vcombine.high %v777, 0.0
        %v782 = vcombine.low %v754, %v761
        %v784 = vunpack.c.l.s4 1983009808
        %v785 = vunpack.c.0.s8 %v784
        %v786 = vlaneseq
        %v787 = vshrl.u32 %v786, 7
        %v788 = vsub.s32 %v785, %v787
        %v789 = vrot.slane %v782, %v788
        %v790 = vcombine.low %v778, %v779
        %v792 = vunpack.c.l.s4 1983009808
        %v793 = vunpack.c.0.s8 %v792
        %v794 = vlaneseq
        %v795 = vshrl.u32 %v794, 7
        %v796 = vsub.s32 %v793, %v795
        %v797 = vrot.slane %v790, %v796
        %v798 = vcombine.low %v770, %v777
        %v800 = vunpack.c.l.s4 1983009808
        %v801 = vunpack.c.0.s8 %v800
        %v802 = vlaneseq
        %v803 = vshrl.u32 %v802, 7
        %v804 = vsub.s32 %v801, %v803
        %v805 = vrot.slane %v798, %v804
        %v806 = vcombine.low %v780, %v781
        %v808 = vunpack.c.l.s4 1983009808
        %v809 = vunpack.c.0.s8 %v808
        %v810 = vlaneseq
        %v811 = vshrl.u32 %v810, 7
        %v812 = vsub.s32 %v809, %v811
        %v813 = vrot.slane %v806, %v812
        %v814 = vcombine.low %v789, %v797
        %v815 = vcombine.high %v789, %v797
        %v817 = vunpack.c.l.s4 1934713408
        %v818 = vunpack.c.0.s8 %v817
        %v819 = vlaneseq
        %v820 = vshrl.u32 %v819, 7
        %v821 = vsub.s32 %v818, %v820
        %v822 = vrot.slane %v814, %v821
        %v824 = vunpack.c.l.s4 1934713408
        %v825 = vunpack.c.0.s8 %v824
        %v826 = vlaneseq
        %v827 = vshrl.u32 %v826, 7
        %v828 = vsub.s32 %v825, %v827
        %v829 = vrot.slane %v815, %v828
        %v830 = vcombine.low %v805, %v813
        %v831 = vcombine.high %v805, %v813
        %v833 = vunpack.c.l.s4 1934713408
        %v834 = vunpack.c.0.s8 %v833
        %v835 = vlaneseq
        %v836 = vshrl.u32 %v835, 7
        %v837 = vsub.s32 %v834, %v836
        %v838 = vrot.slane %v830, %v837
        %v840 = vunpack.c.l.s4 1934713408
        %v841 = vunpack.c.0.s8 %v840
        %v842 = vlaneseq
        %v843 = vshrl.u32 %v842, 7
        %v844 = vsub.s32 %v841, %v843
        %v845 = vrot.slane %v831, %v844
        %v846 = vcombine.low %v822, %v838
        %v847 = vcombine.high %v822, %v838
        %v848 = vcombine.low %v829, %v845
        %v849 = vcombine.high %v829, %v845
        %v850 = vpack.c.bf16 %v846, %v846
        %v851 = vpack.c.bf16 %v847, %v847
        %v852 = vpack.c.bf16 %v848, %v848
        %v853 = vpack.c.bf16 %v849, %v849
        %vm854 = vcmask 60416
        %855 = vst.msk [vmem:[%s464] sm:$0xf] %vm854, %v850
        %856 = vst.msk [vmem:[%s464 + $0x4] sm:$0xf] %vm854, %v851
        %857 = vst.msk [vmem:[%s464 + $0x8] sm:$0xf] %vm854, %v852
        %858 = vst.msk [vmem:[%s464 + $0xc] sm:$0xf] %vm854, %v853
        %860 = vrot.lane.b32.xlu0 %v636, 120
        %v861 = vpop.permute.xlu0 %860
        %863 = vrot.lane.b32.xlu0 %v636, 112
        %v864 = vpop.permute.xlu0 %863
        %866 = vrot.lane.b32.xlu0 %v636, 104
        %v867 = vpop.permute.xlu0 %866
        %v869 = vcombine.low %v636, %v864
        %v870 = vcombine.high %v636, %v864
        %v872 = vunpack.c.l.s4 1983009808
        %v873 = vunpack.c.0.s8 %v872
        %v874 = vlaneseq
        %v875 = vshrl.u32 %v874, 7
        %v876 = vsub.s32 %v873, %v875
        %v877 = vrot.slane %v869, %v876
        %v879 = vunpack.c.l.s4 1983009808
        %v880 = vunpack.c.0.s8 %v879
        %v881 = vlaneseq
        %v882 = vshrl.u32 %v881, 7
        %v883 = vsub.s32 %v880, %v882
        %v884 = vrot.slane %v870, %v883
        %v885 = vcombine.low %v861, %v867
        %v886 = vcombine.high %v861, %v867
        %v888 = vunpack.c.l.s4 1983009808
        %v889 = vunpack.c.0.s8 %v888
        %v890 = vlaneseq
        %v891 = vshrl.u32 %v890, 7
        %v892 = vsub.s32 %v889, %v891
        %v893 = vrot.slane %v885, %v892
        %v895 = vunpack.c.l.s4 1983009808
        %v896 = vunpack.c.0.s8 %v895
        %v897 = vlaneseq
        %v898 = vshrl.u32 %v897, 7
        %v899 = vsub.s32 %v896, %v898
        %v900 = vrot.slane %v886, %v899
        %v901 = vcombine.low %v877, %v893
        %v902 = vcombine.high %v877, %v893
        %v904 = vunpack.c.l.s4 1934713408
        %v905 = vunpack.c.0.s8 %v904
        %v906 = vlaneseq
        %v907 = vshrl.u32 %v906, 7
        %v908 = vsub.s32 %v905, %v907
        %v909 = vrot.slane %v901, %v908
        %v911 = vunpack.c.l.s4 1934713408
        %v912 = vunpack.c.0.s8 %v911
        %v913 = vlaneseq
        %v914 = vshrl.u32 %v913, 7
        %v915 = vsub.s32 %v912, %v914
        %v916 = vrot.slane %v902, %v915
        %v917 = vcombine.low %v884, %v900
        %v918 = vcombine.high %v884, %v900
        %v920 = vunpack.c.l.s4 1934713408
        %v921 = vunpack.c.0.s8 %v920
        %v922 = vlaneseq
        %v923 = vshrl.u32 %v922, 7
        %v924 = vsub.s32 %v921, %v923
        %v925 = vrot.slane %v917, %v924
        %v927 = vunpack.c.l.s4 1934713408
        %v928 = vunpack.c.0.s8 %v927
        %v929 = vlaneseq
        %v930 = vshrl.u32 %v929, 7
        %v931 = vsub.s32 %v928, %v930
        %v932 = vrot.slane %v918, %v931
        %v933 = vcombine.high %v909, 0.0
        %v934 = vcombine.high %v916, 0.0
        %v935 = vcombine.high %v925, 0.0
        %v936 = vcombine.high %v932, 0.0
        %v937 = vcombine.low %v909, %v916
        %v939 = vunpack.c.l.s4 1983009808
        %v940 = vunpack.c.0.s8 %v939
        %v941 = vlaneseq
        %v942 = vshrl.u32 %v941, 7
        %v943 = vsub.s32 %v940, %v942
        %v944 = vrot.slane %v937, %v943
        %v945 = vcombine.low %v933, %v934
        %v947 = vunpack.c.l.s4 1983009808
        %v948 = vunpack.c.0.s8 %v947
        %v949 = vlaneseq
        %v950 = vshrl.u32 %v949, 7
        %v951 = vsub.s32 %v948, %v950
        %v952 = vrot.slane %v945, %v951
        %v953 = vcombine.low %v925, %v932
        %v955 = vunpack.c.l.s4 1983009808
        %v956 = vunpack.c.0.s8 %v955
        %v957 = vlaneseq
        %v958 = vshrl.u32 %v957, 7
        %v959 = vsub.s32 %v956, %v958
        %v960 = vrot.slane %v953, %v959
        %v961 = vcombine.low %v935, %v936
        %v963 = vunpack.c.l.s4 1983009808
        %v964 = vunpack.c.0.s8 %v963
        %v965 = vlaneseq
        %v966 = vshrl.u32 %v965, 7
        %v967 = vsub.s32 %v964, %v966
        %v968 = vrot.slane %v961, %v967
        %v969 = vcombine.low %v944, %v952
        %v970 = vcombine.high %v944, %v952
        %v972 = vunpack.c.l.s4 1934713408
        %v973 = vunpack.c.0.s8 %v972
        %v974 = vlaneseq
        %v975 = vshrl.u32 %v974, 7
        %v976 = vsub.s32 %v973, %v975
        %v977 = vrot.slane %v969, %v976
        %v979 = vunpack.c.l.s4 1934713408
        %v980 = vunpack.c.0.s8 %v979
        %v981 = vlaneseq
        %v982 = vshrl.u32 %v981, 7
        %v983 = vsub.s32 %v980, %v982
        %v984 = vrot.slane %v970, %v983
        %v985 = vcombine.low %v960, %v968
        %v986 = vcombine.high %v960, %v968
        %v988 = vunpack.c.l.s4 1934713408
        %v989 = vunpack.c.0.s8 %v988
        %v990 = vlaneseq
        %v991 = vshrl.u32 %v990, 7
        %v992 = vsub.s32 %v989, %v991
        %v993 = vrot.slane %v985, %v992
        %v995 = vunpack.c.l.s4 1934713408
        %v996 = vunpack.c.0.s8 %v995
        %v997 = vlaneseq
        %v998 = vshrl.u32 %v997, 7
        %v999 = vsub.s32 %v996, %v998
        %v1000 = vrot.slane %v986, %v999
        %v1001 = vcombine.low %v977, %v993
        %v1002 = vcombine.high %v977, %v993
        %v1003 = vcombine.low %v984, %v1000
        %v1004 = vcombine.high %v984, %v1000
        %v1005 = vpack.c.bf16 %v1001, %v1001
        %v1006 = vpack.c.bf16 %v1002, %v1002
        %v1007 = vpack.c.bf16 %v1003, %v1003
        %v1008 = vpack.c.bf16 %v1004, %v1004
        %1009 = vst.msk [vmem:[%s470] sm:$0xf] %vm854, %v1005
        %1010 = vst.msk [vmem:[%s470 + $0x4] sm:$0xf] %vm854, %v1006
        %1011 = vst.msk [vmem:[%s470 + $0x8] sm:$0xf] %vm854, %v1007
        %1012 = vst.msk [vmem:[%s470 + $0xc] sm:$0xf] %vm854, %v1008
        %1014 = vrot.lane.b32.xlu0 %v699, 120
        %v1015 = vpop.permute.xlu0 %1014
        %1017 = vrot.lane.b32.xlu0 %v699, 112
        %v1018 = vpop.permute.xlu0 %1017
        %1020 = vrot.lane.b32.xlu0 %v699, 104
        %v1021 = vpop.permute.xlu0 %1020
        %v1023 = vcombine.low %v699, %v1018
        %v1024 = vcombine.high %v699, %v1018
        %v1026 = vunpack.c.l.s4 1983009808
        %v1027 = vunpack.c.0.s8 %v1026
        %v1028 = vlaneseq
        %v1029 = vshrl.u32 %v1028, 7
        %v1030 = vsub.s32 %v1027, %v1029
        %v1031 = vrot.slane %v1023, %v1030
        %v1033 = vunpack.c.l.s4 1983009808
        %v1034 = vunpack.c.0.s8 %v1033
        %v1035 = vlaneseq
        %v1036 = vshrl.u32 %v1035, 7
        %v1037 = vsub.s32 %v1034, %v1036
        %v1038 = vrot.slane %v1024, %v1037
        %v1039 = vcombine.low %v1015, %v1021
        %v1040 = vcombine.high %v1015, %v1021
        %v1042 = vunpack.c.l.s4 1983009808
        %v1043 = vunpack.c.0.s8 %v1042
        %v1044 = vlaneseq
        %v1045 = vshrl.u32 %v1044, 7
        %v1046 = vsub.s32 %v1043, %v1045
        %v1047 = vrot.slane %v1039, %v1046
        %v1049 = vunpack.c.l.s4 1983009808
        %v1050 = vunpack.c.0.s8 %v1049
        %v1051 = vlaneseq
        %v1052 = vshrl.u32 %v1051, 7
        %v1053 = vsub.s32 %v1050, %v1052
        %v1054 = vrot.slane %v1040, %v1053
        %v1055 = vcombine.low %v1031, %v1047
        %v1056 = vcombine.high %v1031, %v1047
        %v1058 = vunpack.c.l.s4 1934713408
        %v1059 = vunpack.c.0.s8 %v1058
        %v1060 = vlaneseq
        %v1061 = vshrl.u32 %v1060, 7
        %v1062 = vsub.s32 %v1059, %v1061
        %v1063 = vrot.slane %v1055, %v1062
        %v1065 = vunpack.c.l.s4 1934713408
        %v1066 = vunpack.c.0.s8 %v1065
        %v1067 = vlaneseq
        %v1068 = vshrl.u32 %v1067, 7
        %v1069 = vsub.s32 %v1066, %v1068
        %v1070 = vrot.slane %v1056, %v1069
        %v1071 = vcombine.low %v1038, %v1054
        %v1072 = vcombine.high %v1038, %v1054
        %v1074 = vunpack.c.l.s4 1934713408
        %v1075 = vunpack.c.0.s8 %v1074
        %v1076 = vlaneseq
        %v1077 = vshrl.u32 %v1076, 7
        %v1078 = vsub.s32 %v1075, %v1077
        %v1079 = vrot.slane %v1071, %v1078
        %v1081 = vunpack.c.l.s4 1934713408
        %v1082 = vunpack.c.0.s8 %v1081
        %v1083 = vlaneseq
        %v1084 = vshrl.u32 %v1083, 7
        %v1085 = vsub.s32 %v1082, %v1084
        %v1086 = vrot.slane %v1072, %v1085
        %v1087 = vcombine.high %v1063, 0.0
        %v1088 = vcombine.high %v1070, 0.0
        %v1089 = vcombine.high %v1079, 0.0
        %v1090 = vcombine.high %v1086, 0.0
        %v1091 = vcombine.low %v1063, %v1070
        %v1093 = vunpack.c.l.s4 1983009808
        %v1094 = vunpack.c.0.s8 %v1093
        %v1095 = vlaneseq
        %v1096 = vshrl.u32 %v1095, 7
        %v1097 = vsub.s32 %v1094, %v1096
        %v1098 = vrot.slane %v1091, %v1097
        %v1099 = vcombine.low %v1087, %v1088
        %v1101 = vunpack.c.l.s4 1983009808
        %v1102 = vunpack.c.0.s8 %v1101
        %v1103 = vlaneseq
        %v1104 = vshrl.u32 %v1103, 7
        %v1105 = vsub.s32 %v1102, %v1104
        %v1106 = vrot.slane %v1099, %v1105
        %v1107 = vcombine.low %v1079, %v1086
        %v1109 = vunpack.c.l.s4 1983009808
        %v1110 = vunpack.c.0.s8 %v1109
        %v1111 = vlaneseq
        %v1112 = vshrl.u32 %v1111, 7
        %v1113 = vsub.s32 %v1110, %v1112
        %v1114 = vrot.slane %v1107, %v1113
        %v1115 = vcombine.low %v1089, %v1090
        %v1117 = vunpack.c.l.s4 1983009808
        %v1118 = vunpack.c.0.s8 %v1117
        %v1119 = vlaneseq
        %v1120 = vshrl.u32 %v1119, 7
        %v1121 = vsub.s32 %v1118, %v1120
        %v1122 = vrot.slane %v1115, %v1121
        %v1123 = vcombine.low %v1098, %v1106
        %v1124 = vcombine.high %v1098, %v1106
        %v1126 = vunpack.c.l.s4 1934713408
        %v1127 = vunpack.c.0.s8 %v1126
        %v1128 = vlaneseq
        %v1129 = vshrl.u32 %v1128, 7
        %v1130 = vsub.s32 %v1127, %v1129
        %v1131 = vrot.slane %v1123, %v1130
        %v1133 = vunpack.c.l.s4 1934713408
        %v1134 = vunpack.c.0.s8 %v1133
        %v1135 = vlaneseq
        %v1136 = vshrl.u32 %v1135, 7
        %v1137 = vsub.s32 %v1134, %v1136
        %v1138 = vrot.slane %v1124, %v1137
        %v1139 = vcombine.low %v1114, %v1122
        %v1140 = vcombine.high %v1114, %v1122
        %v1142 = vunpack.c.l.s4 1934713408
        %v1143 = vunpack.c.0.s8 %v1142
        %v1144 = vlaneseq
        %v1145 = vshrl.u32 %v1144, 7
        %v1146 = vsub.s32 %v1143, %v1145
        %v1147 = vrot.slane %v1139, %v1146
        %v1149 = vunpack.c.l.s4 1934713408
        %v1150 = vunpack.c.0.s8 %v1149
        %v1151 = vlaneseq
        %v1152 = vshrl.u32 %v1151, 7
        %v1153 = vsub.s32 %v1150, %v1152
        %v1154 = vrot.slane %v1140, %v1153
        %v1155 = vcombine.low %v1131, %v1147
        %v1156 = vcombine.high %v1131, %v1147
        %v1157 = vcombine.low %v1138, %v1154
        %v1158 = vcombine.high %v1138, %v1154
        %v1159 = vpack.c.bf16 %v1155, %v1155
        %v1160 = vpack.c.bf16 %v1156, %v1156
        %v1161 = vpack.c.bf16 %v1157, %v1157
        %v1162 = vpack.c.bf16 %v1158, %v1158
        %1163 = vst.msk [vmem:[%s476] sm:$0xf] %vm854, %v1159
        %1164 = vst.msk [vmem:[%s476 + $0x4] sm:$0xf] %vm854, %v1160
        %1165 = vst.msk [vmem:[%s476 + $0x8] sm:$0xf] %vm854, %v1161
        %1166 = vst.msk [vmem:[%s476 + $0xc] sm:$0xf] %vm854, %v1162
        %s1167 = sand.u32 %s246, 1
        %s1168 = sand.u32 %s246, 1
        %s1169 = smul.addr %s1168, 16
        %s1170 = scalar_lea.vmem [#allocation9], %s1169
        %s1171 = sand.u32 %s274, 1
        %s1172 = sand.u32 %s274, 1
        %s1173 = smul.addr %s1172, 16
        %s1174 = scalar_lea.vmem [#allocation10], %s1173
        %s1175 = sand.u32 %s302, 1
        %s1176 = sand.u32 %s302, 1
        %s1177 = smul.addr %s1176, 16
        %s1178 = scalar_lea.vmem [#allocation11], %s1177
        // Predicated region
        $region73: #{tpu_custom_call.1} parent=55 // pred_check
          %p1179 = pneg %p256
        $region74: #{tpu_custom_call.1} parent=55 // pred_check_branch
          %1181 = sbr.rel (%p1179) target = $region76
        $region75: #{tpu_custom_call.1} parent=55 // pred_region
          %s1182 = smul.addr %s32, 8
          %s1183 = sadd.s32 %s33, %s1182
          %s1184 = smul.addr %s1183, 4
          %s1185 = scalar_lea.vmem %s9, %s1184
          // Predicated region
          $region77: #{tpu_custom_call.1} parent=75 // pred_check
            _
          $region78: #{tpu_custom_call.1} parent=75 // pred_check_branch
            %1187 = sbr.rel (0) target = $region80
          $region79: #{tpu_custom_call.1} parent=75 // pred_region
            // Predicated region
            $region81: #{tpu_custom_call.1} parent=79 // pred_check
              _
            $region82: #{tpu_custom_call.1} parent=79 // pred_check_branch
              %1189 = sbr.rel target = $region84
            $region83: #{tpu_custom_call.1} parent=79 // pred_region
              // Predicated region
              $region96: #{tpu_custom_call.1} parent=83 // pred_check
                _
              $region97: #{tpu_custom_call.1} parent=83 // pred_check_branch
                %1211 = sbr.rel (0) target = $region99
              $region98: #{tpu_custom_call.1} parent=83 // pred_region
                loop: start=0, step=1, limit=1
                $region100: #{tpu_custom_call.1} parent=98 // loop_pre_header
                  _
                $region101: #{tpu_custom_call.1} parent=98 // loop_header
                  %s1213 = sphi 0, %s1217
                  %p1214 = scmp.ge.s32.totalorder %s1213, 1
                  %s1218 = sphi %s1170, %s1170
                  %s1219 = sphi %s1185, %s1185
                $region102: #{tpu_custom_call.1} parent=98 // loop_header_branch
                  %1216 = sbr.rel (%p1214) target = $region106
                $region103: #{tpu_custom_call.1} parent=98 // loop_body
                  _
                $region104: #{tpu_custom_call.1} parent=98 // loop_footer
                  %s1217 = sadd.s32 1, %s1213
                $region105: #{tpu_custom_call.1} parent=98 // loop_footer_branch
                  %1212 = sbr.rel target = $region101
                $region106: #{tpu_custom_call.1} parent=98 // loop_exit
                  _
                %s1221 = ssub.s32 16, 1
                loop: start=0, step=1, limit=1
                $region107: #{tpu_custom_call.1} parent=98 // loop_pre_header
                  _
                $region108: #{tpu_custom_call.1} parent=98 // loop_header
                  %s1223 = sphi 0, %s1227
                  %p1224 = scmp.ge.s32.totalorder %s1223, 1
                  %s1228 = sphi %s1170, %s1170
                  %s1229 = sphi %s1185, %s1185
                $region109: #{tpu_custom_call.1} parent=98 // loop_header_branch
                  %1226 = sbr.rel (%p1224) target = $region113
                $region110: #{tpu_custom_call.1} parent=98 // loop_body
                  %v1230 = vld [vmem:[%s1228] sm:%s1221]
                  %1231 = vst [vmem:[%s1229] sm:%s1221] %v1230
                  %v1232 = vld [vmem:[%s1228 + $0x4] sm:%s1221]
                  %1233 = vst [vmem:[%s1229 + $0x8] sm:%s1221] %v1232
                  %v1234 = vld [vmem:[%s1228 + $0x8] sm:%s1221]
                  %1235 = vst [vmem:[%s1229 + $0x10] sm:%s1221] %v1234
                  %v1236 = vld [vmem:[%s1228 + $0xc] sm:%s1221]
                  %1237 = vst [vmem:[%s1229 + $0x18] sm:%s1221] %v1236
                $region111: #{tpu_custom_call.1} parent=98 // loop_footer
                  %s1227 = sadd.s32 1, %s1223
                $region112: #{tpu_custom_call.1} parent=98 // loop_footer_branch
                  %1222 = sbr.rel target = $region108
                $region113: #{tpu_custom_call.1} parent=98 // loop_exit
                  _
              $region99: #{tpu_custom_call.1} parent=83 // pred_fallthru
                _
            $region84: #{tpu_custom_call.1} parent=79 // pred_fallthru
              _
            // Predicated region
            $region85: #{tpu_custom_call.1} parent=79 // pred_check
              _
            $region86: #{tpu_custom_call.1} parent=79 // pred_check_branch
              %1191 = sbr.rel (0) target = $region88
            $region87: #{tpu_custom_call.1} parent=79 // pred_region
              %s1193 = ssub.s32 16, 1
              loop: start=0, step=1, limit=1
              $region89: #{tpu_custom_call.1} parent=87 // loop_pre_header
                _
              $region90: #{tpu_custom_call.1} parent=87 // loop_header
                %s1195 = sphi 0, %s1199
                %p1196 = scmp.ge.s32.totalorder %s1195, 1
                %s1200 = sphi %s1170, %s1170
                %s1201 = sphi %s1185, %s1185
              $region91: #{tpu_custom_call.1} parent=87 // loop_header_branch
                %1198 = sbr.rel (%p1196) target = $region95
              $region92: #{tpu_custom_call.1} parent=87 // loop_body
                %v1202 = vld [vmem:[%s1200] sm:%s1193]
                %1203 = vst [vmem:[%s1201] sm:%s1193] %v1202
                %v1204 = vld [vmem:[%s1200 + $0x4] sm:%s1193]
                %1205 = vst [vmem:[%s1201 + $0x8] sm:%s1193] %v1204
                %v1206 = vld [vmem:[%s1200 + $0x8] sm:%s1193]
                %1207 = vst [vmem:[%s1201 + $0x10] sm:%s1193] %v1206
                %v1208 = vld [vmem:[%s1200 + $0xc] sm:%s1193]
                %1209 = vst [vmem:[%s1201 + $0x18] sm:%s1193] %v1208
              $region93: #{tpu_custom_call.1} parent=87 // loop_footer
                %s1199 = sadd.s32 1, %s1195
              $region94: #{tpu_custom_call.1} parent=87 // loop_footer_branch
                %1194 = sbr.rel target = $region90
              $region95: #{tpu_custom_call.1} parent=87 // loop_exit
                _
            $region88: #{tpu_custom_call.1} parent=79 // pred_fallthru
              _
          $region80: #{tpu_custom_call.1} parent=75 // pred_fallthru
            _
          %1238 = vnop
        $region76: #{tpu_custom_call.1} parent=55 // pred_fallthru
          _
        // Predicated region
        $region114: #{tpu_custom_call.1} parent=55 // pred_check
          %p1239 = pneg %p284
        $region115: #{tpu_custom_call.1} parent=55 // pred_check_branch
          %1241 = sbr.rel (%p1239) target = $region117
        $region116: #{tpu_custom_call.1} parent=55 // pred_region
          %s1242 = smul.addr %s32, 8
          %s1243 = sadd.s32 %s33, %s1242
          %s1244 = smul.addr %s1243, 4
          %s1245 = scalar_lea.vmem %s10, %s1244
          // Predicated region
          $region118: #{tpu_custom_call.1} parent=116 // pred_check
            _
          $region119: #{tpu_custom_call.1} parent=116 // pred_check_branch
            %1247 = sbr.rel (0) target = $region121
          $region120: #{tpu_custom_call.1} parent=116 // pred_region
            // Predicated region
            $region122: #{tpu_custom_call.1} parent=120 // pred_check
              _
            $region123: #{tpu_custom_call.1} parent=120 // pred_check_branch
              %1249 = sbr.rel target = $region125
            $region124: #{tpu_custom_call.1} parent=120 // pred_region
              // Predicated region
              $region137: #{tpu_custom_call.1} parent=124 // pred_check
                _
              $region138: #{tpu_custom_call.1} parent=124 // pred_check_branch
                %1271 = sbr.rel (0) target = $region140
              $region139: #{tpu_custom_call.1} parent=124 // pred_region
                loop: start=0, step=1, limit=1
                $region141: #{tpu_custom_call.1} parent=139 // loop_pre_header
                  _
                $region142: #{tpu_custom_call.1} parent=139 // loop_header
                  %s1273 = sphi 0, %s1277
                  %p1274 = scmp.ge.s32.totalorder %s1273, 1
                  %s1278 = sphi %s1174, %s1174
                  %s1279 = sphi %s1245, %s1245
                $region143: #{tpu_custom_call.1} parent=139 // loop_header_branch
                  %1276 = sbr.rel (%p1274) target = $region147
                $region144: #{tpu_custom_call.1} parent=139 // loop_body
                  _
                $region145: #{tpu_custom_call.1} parent=139 // loop_footer
                  %s1277 = sadd.s32 1, %s1273
                $region146: #{tpu_custom_call.1} parent=139 // loop_footer_branch
                  %1272 = sbr.rel target = $region142
                $region147: #{tpu_custom_call.1} parent=139 // loop_exit
                  _
                %s1281 = ssub.s32 16, 1
                loop: start=0, step=1, limit=1
                $region148: #{tpu_custom_call.1} parent=139 // loop_pre_header
                  _
                $region149: #{tpu_custom_call.1} parent=139 // loop_header
                  %s1283 = sphi 0, %s1287
                  %p1284 = scmp.ge.s32.totalorder %s1283, 1
                  %s1288 = sphi %s1174, %s1174
                  %s1289 = sphi %s1245, %s1245
                $region150: #{tpu_custom_call.1} parent=139 // loop_header_branch
                  %1286 = sbr.rel (%p1284) target = $region154
                $region151: #{tpu_custom_call.1} parent=139 // loop_body
                  %v1290 = vld [vmem:[%s1288] sm:%s1281]
                  %1291 = vst [vmem:[%s1289] sm:%s1281] %v1290
                  %v1292 = vld [vmem:[%s1288 + $0x4] sm:%s1281]
                  %1293 = vst [vmem:[%s1289 + $0x8] sm:%s1281] %v1292
                  %v1294 = vld [vmem:[%s1288 + $0x8] sm:%s1281]
                  %1295 = vst [vmem:[%s1289 + $0x10] sm:%s1281] %v1294
                  %v1296 = vld [vmem:[%s1288 + $0xc] sm:%s1281]
                  %1297 = vst [vmem:[%s1289 + $0x18] sm:%s1281] %v1296
                $region152: #{tpu_custom_call.1} parent=139 // loop_footer
                  %s1287 = sadd.s32 1, %s1283
                $region153: #{tpu_custom_call.1} parent=139 // loop_footer_branch
                  %1282 = sbr.rel target = $region149
                $region154: #{tpu_custom_call.1} parent=139 // loop_exit
                  _
              $region140: #{tpu_custom_call.1} parent=124 // pred_fallthru
                _
            $region125: #{tpu_custom_call.1} parent=120 // pred_fallthru
              _
            // Predicated region
            $region126: #{tpu_custom_call.1} parent=120 // pred_check
              _
            $region127: #{tpu_custom_call.1} parent=120 // pred_check_branch
              %1251 = sbr.rel (0) target = $region129
            $region128: #{tpu_custom_call.1} parent=120 // pred_region
              %s1253 = ssub.s32 16, 1
              loop: start=0, step=1, limit=1
              $region130: #{tpu_custom_call.1} parent=128 // loop_pre_header
                _
              $region131: #{tpu_custom_call.1} parent=128 // loop_header
                %s1255 = sphi 0, %s1259
                %p1256 = scmp.ge.s32.totalorder %s1255, 1
                %s1260 = sphi %s1174, %s1174
                %s1261 = sphi %s1245, %s1245
              $region132: #{tpu_custom_call.1} parent=128 // loop_header_branch
                %1258 = sbr.rel (%p1256) target = $region136
              $region133: #{tpu_custom_call.1} parent=128 // loop_body
                %v1262 = vld [vmem:[%s1260] sm:%s1253]
                %1263 = vst [vmem:[%s1261] sm:%s1253] %v1262
                %v1264 = vld [vmem:[%s1260 + $0x4] sm:%s1253]
                %1265 = vst [vmem:[%s1261 + $0x8] sm:%s1253] %v1264
                %v1266 = vld [vmem:[%s1260 + $0x8] sm:%s1253]
                %1267 = vst [vmem:[%s1261 + $0x10] sm:%s1253] %v1266
                %v1268 = vld [vmem:[%s1260 + $0xc] sm:%s1253]
                %1269 = vst [vmem:[%s1261 + $0x18] sm:%s1253] %v1268
              $region134: #{tpu_custom_call.1} parent=128 // loop_footer
                %s1259 = sadd.s32 1, %s1255
              $region135: #{tpu_custom_call.1} parent=128 // loop_footer_branch
                %1254 = sbr.rel target = $region131
              $region136: #{tpu_custom_call.1} parent=128 // loop_exit
                _
            $region129: #{tpu_custom_call.1} parent=120 // pred_fallthru
              _
          $region121: #{tpu_custom_call.1} parent=116 // pred_fallthru
            _
          %1298 = vnop
        $region117: #{tpu_custom_call.1} parent=55 // pred_fallthru
          _
        // Predicated region
        $region155: #{tpu_custom_call.1} parent=55 // pred_check
          %p1299 = pneg %p312
        $region156: #{tpu_custom_call.1} parent=55 // pred_check_branch
          %1301 = sbr.rel (%p1299) target = $region158
        $region157: #{tpu_custom_call.1} parent=55 // pred_region
          %s1302 = smul.addr %s32, 8
          %s1303 = sadd.s32 %s33, %s1302
          %s1304 = smul.addr %s1303, 4
          %s1305 = scalar_lea.vmem %s11, %s1304
          // Predicated region
          $region159: #{tpu_custom_call.1} parent=157 // pred_check
            _
          $region160: #{tpu_custom_call.1} parent=157 // pred_check_branch
            %1307 = sbr.rel (0) target = $region162
          $region161: #{tpu_custom_call.1} parent=157 // pred_region
            // Predicated region
            $region163: #{tpu_custom_call.1} parent=161 // pred_check
              _
            $region164: #{tpu_custom_call.1} parent=161 // pred_check_branch
              %1309 = sbr.rel target = $region166
            $region165: #{tpu_custom_call.1} parent=161 // pred_region
              // Predicated region
              $region178: #{tpu_custom_call.1} parent=165 // pred_check
                _
              $region179: #{tpu_custom_call.1} parent=165 // pred_check_branch
                %1331 = sbr.rel (0) target = $region181
              $region180: #{tpu_custom_call.1} parent=165 // pred_region
                loop: start=0, step=1, limit=1
                $region182: #{tpu_custom_call.1} parent=180 // loop_pre_header
                  _
                $region183: #{tpu_custom_call.1} parent=180 // loop_header
                  %s1333 = sphi 0, %s1337
                  %p1334 = scmp.ge.s32.totalorder %s1333, 1
                  %s1338 = sphi %s1178, %s1178
                  %s1339 = sphi %s1305, %s1305
                $region184: #{tpu_custom_call.1} parent=180 // loop_header_branch
                  %1336 = sbr.rel (%p1334) target = $region188
                $region185: #{tpu_custom_call.1} parent=180 // loop_body
                  _
                $region186: #{tpu_custom_call.1} parent=180 // loop_footer
                  %s1337 = sadd.s32 1, %s1333
                $region187: #{tpu_custom_call.1} parent=180 // loop_footer_branch
                  %1332 = sbr.rel target = $region183
                $region188: #{tpu_custom_call.1} parent=180 // loop_exit
                  _
                %s1341 = ssub.s32 16, 1
                loop: start=0, step=1, limit=1
                $region189: #{tpu_custom_call.1} parent=180 // loop_pre_header
                  _
                $region190: #{tpu_custom_call.1} parent=180 // loop_header
                  %s1343 = sphi 0, %s1347
                  %p1344 = scmp.ge.s32.totalorder %s1343, 1
                  %s1348 = sphi %s1178, %s1178
                  %s1349 = sphi %s1305, %s1305
                $region191: #{tpu_custom_call.1} parent=180 // loop_header_branch
                  %1346 = sbr.rel (%p1344) target = $region195
                $region192: #{tpu_custom_call.1} parent=180 // loop_body
                  %v1350 = vld [vmem:[%s1348] sm:%s1341]
                  %1351 = vst [vmem:[%s1349] sm:%s1341] %v1350
                  %v1352 = vld [vmem:[%s1348 + $0x4] sm:%s1341]
                  %1353 = vst [vmem:[%s1349 + $0x8] sm:%s1341] %v1352
                  %v1354 = vld [vmem:[%s1348 + $0x8] sm:%s1341]
                  %1355 = vst [vmem:[%s1349 + $0x10] sm:%s1341] %v1354
                  %v1356 = vld [vmem:[%s1348 + $0xc] sm:%s1341]
                  %1357 = vst [vmem:[%s1349 + $0x18] sm:%s1341] %v1356
                $region193: #{tpu_custom_call.1} parent=180 // loop_footer
                  %s1347 = sadd.s32 1, %s1343
                $region194: #{tpu_custom_call.1} parent=180 // loop_footer_branch
                  %1342 = sbr.rel target = $region190
                $region195: #{tpu_custom_call.1} parent=180 // loop_exit
                  _
              $region181: #{tpu_custom_call.1} parent=165 // pred_fallthru
                _
            $region166: #{tpu_custom_call.1} parent=161 // pred_fallthru
              _
            // Predicated region
            $region167: #{tpu_custom_call.1} parent=161 // pred_check
              _
            $region168: #{tpu_custom_call.1} parent=161 // pred_check_branch
              %1311 = sbr.rel (0) target = $region170
            $region169: #{tpu_custom_call.1} parent=161 // pred_region
              %s1313 = ssub.s32 16, 1
              loop: start=0, step=1, limit=1
              $region171: #{tpu_custom_call.1} parent=169 // loop_pre_header
                _
              $region172: #{tpu_custom_call.1} parent=169 // loop_header
                %s1315 = sphi 0, %s1319
                %p1316 = scmp.ge.s32.totalorder %s1315, 1
                %s1320 = sphi %s1178, %s1178
                %s1321 = sphi %s1305, %s1305
              $region173: #{tpu_custom_call.1} parent=169 // loop_header_branch
                %1318 = sbr.rel (%p1316) target = $region177
              $region174: #{tpu_custom_call.1} parent=169 // loop_body
                %v1322 = vld [vmem:[%s1320] sm:%s1313]
                %1323 = vst [vmem:[%s1321] sm:%s1313] %v1322
                %v1324 = vld [vmem:[%s1320 + $0x4] sm:%s1313]
                %1325 = vst [vmem:[%s1321 + $0x8] sm:%s1313] %v1324
                %v1326 = vld [vmem:[%s1320 + $0x8] sm:%s1313]
                %1327 = vst [vmem:[%s1321 + $0x10] sm:%s1313] %v1326
                %v1328 = vld [vmem:[%s1320 + $0xc] sm:%s1313]
                %1329 = vst [vmem:[%s1321 + $0x18] sm:%s1313] %v1328
              $region175: #{tpu_custom_call.1} parent=169 // loop_footer
                %s1319 = sadd.s32 1, %s1315
              $region176: #{tpu_custom_call.1} parent=169 // loop_footer_branch
                %1314 = sbr.rel target = $region172
              $region177: #{tpu_custom_call.1} parent=169 // loop_exit
                _
            $region170: #{tpu_custom_call.1} parent=161 // pred_fallthru
              _
          $region162: #{tpu_custom_call.1} parent=157 // pred_fallthru
            _
          %1358 = vnop
        $region158: #{tpu_custom_call.1} parent=55 // pred_fallthru
          _
      $region56: #{tpu_custom_call.1} parent=5 // pred_fallthru
        _
      %p1359 = scmp.le.s32.totalorder 2, %s23
      // Predicated region
      $region196: #{tpu_custom_call.1} parent=5 // pred_check
        %p1360 = pneg %p1359
      $region197: #{tpu_custom_call.1} parent=5 // pred_check_branch
        %1362 = sbr.rel (%p1360) target = $region199
      $region198: #{tpu_custom_call.1} parent=5 // pred_region
        %s1363 = ssub.s32 %s23, 2
        // Predicated region
        $region200: #{tpu_custom_call.1} parent=198 // pred_check
          %p1364 = pneg %p262
        $region201: #{tpu_custom_call.1} parent=198 // pred_check_branch
          %1366 = sbr.rel (%p1364) target = $region203
        $region202: #{tpu_custom_call.1} parent=198 // pred_region
          %s1367 = sand.u32 %s247, 1
          %s1368 = sand.u32 %s247, 1
          %s1369 = smul.addr %s1368, 16
          %s1370 = scalar_lea.vmem [#allocation9], %s1369
        $region203: #{tpu_custom_call.1} parent=198 // pred_fallthru
          _
        // Predicated region
        $region204: #{tpu_custom_call.1} parent=198 // pred_check
          %p1371 = pneg %p290
        $region205: #{tpu_custom_call.1} parent=198 // pred_check_branch
          %1373 = sbr.rel (%p1371) target = $region207
        $region206: #{tpu_custom_call.1} parent=198 // pred_region
          %s1374 = sand.u32 %s275, 1
          %s1375 = sand.u32 %s275, 1
          %s1376 = smul.addr %s1375, 16
          %s1377 = scalar_lea.vmem [#allocation10], %s1376
        $region207: #{tpu_custom_call.1} parent=198 // pred_fallthru
          _
        // Predicated region
        $region208: #{tpu_custom_call.1} parent=198 // pred_check
          %p1378 = pneg %p318
        $region209: #{tpu_custom_call.1} parent=198 // pred_check_branch
          %1380 = sbr.rel (%p1378) target = $region211
        $region210: #{tpu_custom_call.1} parent=198 // pred_region
          %s1381 = sand.u32 %s303, 1
          %s1382 = sand.u32 %s303, 1
          %s1383 = smul.addr %s1382, 16
          %s1384 = scalar_lea.vmem [#allocation11], %s1383
        $region211: #{tpu_custom_call.1} parent=198 // pred_fallthru
          _
      $region199: #{tpu_custom_call.1} parent=5 // pred_fallthru
        _
    $region6: #{tpu_custom_call.1} parent=1 // loop_footer
      %s27 = sadd.s32 1, %s23
    $region7: #{tpu_custom_call.1} parent=1 // loop_footer_branch
      %22 = sbr.rel target = $region3
    $region8: #{tpu_custom_call.1} parent=1 // loop_exit
      _
    %1385 = vsyncpa [#allocation3], 1
    %s1386 = scalar_lea.sflag [#allocation3], 1
    %1387 = vsyncpa %s1386, 1
    %1388 = vsyncpa [#allocation5], 1
    %1389 = vsyncpa [#allocation8], 1

</llo_original>
